<compile_context>
chip_gen: v7x
topology: tpu7x:2x2x1
jax: 0.10.0
libtpu: 0.0.40
codegen_flags: <defaults>
</compile_context>

<pallas_src>
import numpy as np
import jax
import jax.numpy as jnp
from jax.experimental import pallas as pl
from jax.experimental.pallas import tpu as pltpu

K1 = 5            # conv1 kernel size
K2 = 5            # conv2 kernel size
POOL_OUT = 5      # AdaptiveMaxPool1d output size
NUM_CLASSES = 10
BATCH_TILE = 512  # lane-axis batch tile (multiple of 128)


def _round_up(x, m):
    return ((x + m - 1) // m) * m


def _conv1_pool_toeplitz(w1, L, P1, P1P):
    """Block-Toeplitz matrix for conv1 with MaxPool-friendly row order.

    Row (o*2 + a)*P1P + p holds conv1 output channel o at position 2*p + a
    (for p < P1; other rows are all-zero).  Column c*L + j is input x[c, j].
    Built with gather/where only -> exact f32, no matmul-precision concerns.
    """
    C1_, Cin_, K = w1.shape
    a = np.arange(2)[:, None, None]
    p = np.arange(P1P)[None, :, None]
    j = np.arange(L)[None, None, :]
    tap = j - (2 * p + a)                                    # (2, P1P, L)
    valid = (tap >= 0) & (tap < K) & (p < P1)
    tap = np.clip(tap, 0, K - 1)
    t = jnp.take(w1, jnp.asarray(tap), axis=2)               # (C1, Cin, 2, P1P, L)
    t = jnp.where(jnp.asarray(valid)[None, None], t, 0.0)
    t = jnp.transpose(t, (0, 2, 3, 1, 4))                    # (C1, 2, P1P, Cin, L)
    return t.reshape(C1_ * 2 * P1P, Cin_ * L)


def _conv2_toeplitz(w2, P1P, L2, L2P):
    """Block-Toeplitz matrix for conv2.

    Row o*L2P + l holds conv2 output channel o at position l (for l < L2;
    other rows are all-zero).  Column c*P1P + j is pooled[c, j]; columns with
    j >= P1 are never referenced (zero), so pooled's pad rows are inert.
    """
    C2_, C1_, K = w2.shape
    l = np.arange(L2P)[:, None]
    j = np.arange(P1P)[None, :]
    tap = j - l                                              # (L2P, P1P)
    valid = (tap >= 0) & (tap < K) & (l < L2)
    tap = np.clip(tap, 0, K - 1)
    t = jnp.take(w2, jnp.asarray(tap), axis=2)               # (C2, C1, L2P, P1P)
    t = jnp.where(jnp.asarray(valid)[None, None], t, 0.0)
    t = jnp.transpose(t, (0, 2, 1, 3))                       # (C2, L2P, C1, P1P)
    return t.reshape(C2_ * L2P, C1_ * P1P)


def _make_kernel(C1, C2, P1P, L2, L2P, pool_out):
    """Fused LeNet-1d forward for one lane-dense batch tile."""

    def kernel(x_ref, w1t_ref, b1_ref, w2t_ref, b2_ref,
               fc1w_ref, fc1b_ref, fc2w_ref, fc2b_ref,
               fcw_ref, fcb_ref, out_ref):
        tn = x_ref.shape[-1]

        # ---- conv1: block-Toeplitz matmul on the MXU ----
        # w1t row order is (out_ch, parity, pooled_pos), so MaxPool1d(2,2)
        # below is an elementwise max of the two parity slabs.
        h = jnp.dot(w1t_ref[...], x_ref[...],
                    preferred_element_type=jnp.float32)      # (C1*2*P1P, tn)
        h = h.reshape(C1, 2, P1P, tn)                         # free: P1P % 8 == 0
        # MaxPool1d(2,2), then bias + ReLU (monotone, so the swap is exact).
        pooled = jnp.maximum(
            jnp.maximum(h[:, 0], h[:, 1]) + b1_ref[...][:, None, :], 0.0)

        # ---- conv2: block-Toeplitz matmul on the MXU + bias + ReLU ----
        # Columns hitting pooled rows >= P1 are zero, so pad garbage is inert.
        g = jnp.dot(w2t_ref[...], pooled.reshape(C1 * P1P, tn),
                    preferred_element_type=jnp.float32)      # (C2*L2P, tn)
        g = jnp.maximum(g.reshape(C2, L2P, tn) + b2_ref[...][:, None, :], 0.0)

        # ---- AdaptiveMaxPool1d(pool_out) + Flatten ----
        # PyTorch floor/ceil segment boundaries over the valid length L2; each
        # segment max is a sublane reduction, concatenated along sublanes ->
        # rows ordered t*C2 + c (fc1 weight columns pre-permuted to match).
        segs = []
        for t in range(pool_out):
            s = (t * L2) // pool_out
            e = -(-((t + 1) * L2) // pool_out)
            segs.append(jnp.max(g[:, s:e, :], axis=1))        # (C2, tn)
        flat = jnp.concatenate(segs, axis=0)                   # (pool_out*C2, tn)

        # ---- fc1 -> ReLU -> fc2 -> ReLU -> fc (lane-dense MXU matmuls) ----
        z = jnp.dot(fc1w_ref[...], flat, preferred_element_type=jnp.float32)
        z = jnp.maximum(z + fc1b_ref[...], 0.0)
        z = jnp.dot(fc2w_ref[...], z, preferred_element_type=jnp.float32)
        z = jnp.maximum(z + fc2b_ref[...], 0.0)
        z = jnp.dot(fcw_ref[...], z, preferred_element_type=jnp.float32)
        out_ref[...] = z + fcb_ref[...]                        # (num_classes, tn)

    return kernel


def lenet_forward(x_ncl, params, *, batch_tile=BATCH_TILE,
                  core_parallel_batch=False):
    """x_ncl: (N, Cin, L) float32, PyTorch NCL layout -> (N, num_classes)."""
    N, cin, L = x_ncl.shape
    L1 = L - (K1 - 1)                 # conv1 output length
    P1 = L1 // 2                      # after MaxPool1d(2, 2)
    L2 = P1 - (K2 - 1)                # conv2 output length
    if L1 < 2 or L2 < POOL_OUT:
        raise ValueError(f"input length {L} too short for LeNet-1d")
    P1P = _round_up(P1, 8)            # sublane-padded pooled length
    L2P = _round_up(L2, 8)            # sublane-padded conv2 length

    c1 = params["conv1_w"].shape[0]
    c2 = params["conv2_w"].shape[0]

    # Lane-axis batch tile: big enough to amortize per-step overhead and fill
    # the MXU N dimension, but never bigger than the (padded) batch itself.
    tn = min(_round_up(batch_tile, 128), max(128, _round_up(N, 128)))
    n_pad = _round_up(N, tn)

    # Batch on the lane axis: (Cin*L, n_pad).
    # TODO(synk): for very large N this transpose is one extra HBM round trip
    # of the input; it could be folded into the kernel's first matmul instead.
    x = jnp.transpose(jnp.reshape(x_ncl.astype(jnp.float32), (N, cin * L)))
    if n_pad != N:
        x = jnp.pad(x, ((0, 0), (0, n_pad - N)))

    f32 = lambda a: jnp.asarray(a, jnp.float32)

    def lanes(b):                      # pre-broadcast bias to lane width
        b = f32(b).reshape(-1, 1)
        return jnp.broadcast_to(b, (b.shape[0], tn))

    w1t = _conv1_pool_toeplitz(f32(params["conv1_w"]), L, P1, P1P)
    w2t = _conv2_toeplitz(f32(params["conv2_w"]), P1P, L2, L2P)
    b1b = lanes(params["conv1_b"])
    b2b = lanes(params["conv2_b"])
    # PyTorch flatten order is col = c*POOL_OUT + t; the kernel emits rows
    # t*C2 + c, so permute fc1's weight columns (reshape/transpose, no gather).
    fc1w = f32(params["fc1_w"])
    fc1w = fc1w.reshape(fc1w.shape[0], c2, POOL_OUT)
    fc1w = jnp.transpose(fc1w, (0, 2, 1)).reshape(fc1w.shape[0], POOL_OUT * c2)
    fc1b = lanes(params["fc1_b"])
    fc2w = f32(params["fc2_w"])
    fc2b = lanes(params["fc2_b"])
    fcw = f32(params["fc_w"])
    fcb = lanes(params["fc_b"])
    num_classes = fcw.shape[0]

    weights = (w1t, b1b, w2t, b2b, fc1w, fc1b, fc2w, fc2b, fcw, fcb)

    def resident(a):                   # whole array resident in VMEM every step
        return pl.BlockSpec(a.shape, lambda i: (0, 0))

    dim_sem = ((pltpu.CORE_PARALLEL,) if core_parallel_batch
               else ("parallel",))     # CORE_PARALLEL: split the batch tiles
                                       # across v7x's two TensorCores

    out = pl.pallas_call(
        _make_kernel(c1, c2, P1P, L2, L2P, POOL_OUT),
        out_shape=jax.ShapeDtypeStruct((num_classes, n_pad), jnp.float32),
        grid_spec=pltpu.PrefetchScalarGridSpec(
            num_scalar_prefetch=0,
            grid=(n_pad // tn,),
            in_specs=[pl.BlockSpec((cin * L, tn), lambda i: (0, i))]
                     + [resident(w) for w in weights],
            out_specs=pl.BlockSpec((num_classes, tn), lambda i: (0, i)),
        ),
        compiler_params=pltpu.CompilerParams(
            dimension_semantics=dim_sem,
            vmem_limit_bytes=32 * 1024 * 1024,   # ~5 MiB actually used at TN=512
        ),
    )(x, *weights)

    return out[:, :N].T                                   # (N, num_classes)


def lenet_reference(x, params):
    """Pure-JAX reference mirroring the PyTorch forward (NCL layout)."""
    def conv1d(x, w, b):
        out = jax.lax.conv_general_dilated(
            x, w, window_strides=(1,), padding="VALID",
            dimension_numbers=("NCH", "OIH", "NCH"))
        return out + b[None, :, None]

    h = jax.nn.relu(conv1d(x, params["conv1_w"], params["conv1_b"]))
    N, C, L1 = h.shape
    P1 = L1 // 2
    h = jnp.max(h[:, :, :2 * P1].reshape(N, C, P1, 2), axis=3)
    g = jax.nn.relu(conv1d(h, params["conv2_w"], params["conv2_b"]))
    L2 = g.shape[2]
    segs = []
    for i in range(POOL_OUT):
        s = (i * L2) // POOL_OUT
        e = ((i + 1) * L2 + POOL_OUT - 1) // POOL_OUT
        segs.append(jnp.max(g[:, :, s:e], axis=2))
    pooled = jnp.stack(segs, axis=2)                   # (N, 16, 5)
    flat = pooled.reshape(N, -1)                       # PyTorch flatten order
    z = jax.nn.relu(flat @ params["fc1_w"].T + params["fc1_b"])
    z = jax.nn.relu(z @ params["fc2_w"].T + params["fc2_b"])
    return z @ params["fc_w"].T + params["fc_b"]


if __name__ == "__main__":
    C1, C2 = 6, 16
    key = jax.random.PRNGKey(0)
    ks = jax.random.split(key, 12)
    params = {
        "conv1_w": 0.3 * jax.random.normal(ks[0], (C1, 1, K1), jnp.float32),
        "conv1_b": 0.1 * jax.random.normal(ks[1], (C1,), jnp.float32),
        "conv2_w": 0.2 * jax.random.normal(ks[2], (C2, C1, K2), jnp.float32),
        "conv2_b": 0.1 * jax.random.normal(ks[3], (C2,), jnp.float32),
        "fc1_w": 0.2 * jax.random.normal(ks[4], (30, C2 * POOL_OUT), jnp.float32),
        "fc1_b": 0.1 * jax.random.normal(ks[5], (30,), jnp.float32),
        "fc2_w": 0.2 * jax.random.normal(ks[6], (10, 30), jnp.float32),
        "fc2_b": 0.1 * jax.random.normal(ks[7], (10,), jnp.float32),
        "fc_w": 0.2 * jax.random.normal(ks[8], (NUM_CLASSES, 10), jnp.float32),
        "fc_b": 0.1 * jax.random.normal(ks[9], (NUM_CLASSES,), jnp.float32),
    }

    # Small input consistent with the module: batch=2, in_channel=1, length=64.
    x_small = jax.random.normal(ks[10], (2, 1, 64), jnp.float32)
    out = jax.block_until_ready(lenet_forward(x_small, params))
    ref = lenet_reference(x_small, params)
    assert out.shape == (2, NUM_CLASSES)
    if not jnp.allclose(out, ref, atol=1e-4, rtol=1e-4):
        raise AssertionError("Pallas kernel does not match reference (small batch)")

    # Larger batch exercising multiple 512-wide grid steps and tail padding.
    x_big = jax.random.normal(ks[11], (700, 1, 64), jnp.float32)
    out_big = jax.block_until_ready(lenet_forward(x_big, params))
    ref_big = lenet_reference(x_big, params)
    if not jnp.allclose(out_big, ref_big, atol=1e-4, rtol=1e-4):
        raise AssertionError("Pallas kernel does not match reference (batched)")

    print("KERNEL_OK")
</pallas_src>

<mosaic_0001>
module attributes {stable_mosaic.version = 11 : i64} {
  func.func @kernel(%arg0: i32, %arg1: memref<64x128xf32, #tpu.memory_space<vmem>>, %arg2: memref<384x64xf32, #tpu.memory_space<vmem>>, %arg3: memref<6x128xf32, #tpu.memory_space<vmem>>, %arg4: memref<512x192xf32, #tpu.memory_space<vmem>>, %arg5: memref<16x128xf32, #tpu.memory_space<vmem>>, %arg6: memref<30x80xf32, #tpu.memory_space<vmem>>, %arg7: memref<30x128xf32, #tpu.memory_space<vmem>>, %arg8: memref<10x30xf32, #tpu.memory_space<vmem>>, %arg9: memref<10x128xf32, #tpu.memory_space<vmem>>, %arg10: memref<10x10xf32, #tpu.memory_space<vmem>>, %arg11: memref<10x128xf32, #tpu.memory_space<vmem>>, %arg12: memref<10x128xf32, #tpu.memory_space<vmem>>) attributes {dimension_semantics = [#tpu.dimension_semantics<parallel>], iteration_bounds = array<i64: 1>, scalar_prefetch = 0 : i64, scratch_operands = 0 : i64, tpu.core_type = #tpu.core_type<tc>, window_params = [{transform_indices = @transform_0, window_bounds = array<i64: 64, 128>}, {pipeline_mode = #tpu.pipeline_mode<synchronous>, transform_indices = @transform_1, window_bounds = array<i64: 384, 64>}, {pipeline_mode = #tpu.pipeline_mode<synchronous>, transform_indices = @transform_2, window_bounds = array<i64: 6, 128>}, {pipeline_mode = #tpu.pipeline_mode<synchronous>, transform_indices = @transform_3, window_bounds = array<i64: 512, 192>}, {pipeline_mode = #tpu.pipeline_mode<synchronous>, transform_indices = @transform_4, window_bounds = array<i64: 16, 128>}, {pipeline_mode = #tpu.pipeline_mode<synchronous>, transform_indices = @transform_5, window_bounds = array<i64: 30, 80>}, {pipeline_mode = #tpu.pipeline_mode<synchronous>, transform_indices = @transform_6, window_bounds = array<i64: 30, 128>}, {pipeline_mode = #tpu.pipeline_mode<synchronous>, transform_indices = @transform_7, window_bounds = array<i64: 10, 30>}, {pipeline_mode = #tpu.pipeline_mode<synchronous>, transform_indices = @transform_8, window_bounds = array<i64: 10, 128>}, {pipeline_mode = #tpu.pipeline_mode<synchronous>, transform_indices = @transform_9, window_bounds = array<i64: 10, 10>}, {pipeline_mode = #tpu.pipeline_mode<synchronous>, transform_indices = @transform_10, window_bounds = array<i64: 10, 128>}, {transform_indices = @transform_11, window_bounds = array<i64: 10, 128>}]} {
    %c0 = arith.constant 0 : index
    %c0_0 = arith.constant 0 : index
    %0 = vector.load %arg2[%c0, %c0_0] : memref<384x64xf32, #tpu.memory_space<vmem>>, vector<384x64xf32>
    %c0_1 = arith.constant 0 : index
    %c0_2 = arith.constant 0 : index
    %1 = vector.load %arg1[%c0_1, %c0_2] : memref<64x128xf32, #tpu.memory_space<vmem>>, vector<64x128xf32>
    %cst = arith.constant dense<0.000000e+00> : vector<384x128xf32>
    %2 = tpu.matmul %0, %1, %cst {dimension_numbers = #tpu.dot_dimension_numbers<[1], [0], [0], [1], [0, 0, 1, 1], [], []>} : vector<384x64xf32>, vector<64x128xf32>, vector<384x128xf32> -> vector<384x128xf32>
    %3 = vector.shape_cast %2 : vector<384x128xf32> to vector<6x2x32x128xf32>
    %4 = vector.extract_strided_slice %3 {offsets = [0, 0, 0, 0], sizes = [6, 1, 32, 128], strides = [1, 1, 1, 1]} : vector<6x2x32x128xf32> to vector<6x1x32x128xf32>
    %5 = vector.shape_cast %4 : vector<6x1x32x128xf32> to vector<6x32x128xf32>
    %6 = vector.extract_strided_slice %3 {offsets = [0, 1, 0, 0], sizes = [6, 1, 32, 128], strides = [1, 1, 1, 1]} : vector<6x2x32x128xf32> to vector<6x1x32x128xf32>
    %7 = vector.shape_cast %6 : vector<6x1x32x128xf32> to vector<6x32x128xf32>
    %8 = arith.maximumf %5, %7 : vector<6x32x128xf32>
    %c0_3 = arith.constant 0 : index
    %c0_4 = arith.constant 0 : index
    %9 = vector.load %arg3[%c0_3, %c0_4] : memref<6x128xf32, #tpu.memory_space<vmem>>, vector<6x128xf32>
    %10 = vector.shape_cast %9 : vector<6x128xf32> to vector<6x1x128xf32>
    %11 = vector.broadcast %10 : vector<6x1x128xf32> to vector<6x32x128xf32>
    %12 = arith.addf %8, %11 : vector<6x32x128xf32>
    %cst_5 = arith.constant 0.000000e+00 : f32
    %13 = vector.broadcast %cst_5 : f32 to vector<6x32x128xf32>
    %14 = arith.maximumf %12, %13 : vector<6x32x128xf32>
    %c0_6 = arith.constant 0 : index
    %c0_7 = arith.constant 0 : index
    %15 = vector.load %arg4[%c0_6, %c0_7] : memref<512x192xf32, #tpu.memory_space<vmem>>, vector<512x192xf32>
    %16 = vector.shape_cast %14 : vector<6x32x128xf32> to vector<192x128xf32>
    %cst_8 = arith.constant dense<0.000000e+00> : vector<512x128xf32>
    %17 = tpu.matmul %15, %16, %cst_8 {dimension_numbers = #tpu.dot_dimension_numbers<[1], [0], [0], [1], [0, 0, 1, 1], [], []>} : vector<512x192xf32>, vector<192x128xf32>, vector<512x128xf32> -> vector<512x128xf32>
    %18 = vector.shape_cast %17 : vector<512x128xf32> to vector<16x32x128xf32>
    %c0_9 = arith.constant 0 : index
    %c0_10 = arith.constant 0 : index
    %19 = vector.load %arg5[%c0_9, %c0_10] : memref<16x128xf32, #tpu.memory_space<vmem>>, vector<16x128xf32>
    %20 = vector.shape_cast %19 : vector<16x128xf32> to vector<16x1x128xf32>
    %21 = vector.broadcast %20 : vector<16x1x128xf32> to vector<16x32x128xf32>
    %22 = arith.addf %18, %21 : vector<16x32x128xf32>
    %cst_11 = arith.constant 0.000000e+00 : f32
    %23 = vector.broadcast %cst_11 : f32 to vector<16x32x128xf32>
    %24 = arith.maximumf %22, %23 : vector<16x32x128xf32>
    %25 = vector.extract_strided_slice %24 {offsets = [0, 0, 0], sizes = [16, 6, 128], strides = [1, 1, 1]} : vector<16x32x128xf32> to vector<16x6x128xf32>
    %cst_12 = arith.constant dense<0xFF800000> : vector<16x128xf32>
    %26 = vector.multi_reduction <maximumf>, %25, %cst_12 [1] : vector<16x6x128xf32> to vector<16x128xf32>
    %27 = vector.extract_strided_slice %24 {offsets = [0, 5, 0], sizes = [16, 6, 128], strides = [1, 1, 1]} : vector<16x32x128xf32> to vector<16x6x128xf32>
    %cst_13 = arith.constant dense<0xFF800000> : vector<16x128xf32>
    %28 = vector.multi_reduction <maximumf>, %27, %cst_13 [1] : vector<16x6x128xf32> to vector<16x128xf32>
    %29 = vector.extract_strided_slice %24 {offsets = [0, 10, 0], sizes = [16, 6, 128], strides = [1, 1, 1]} : vector<16x32x128xf32> to vector<16x6x128xf32>
    %cst_14 = arith.constant dense<0xFF800000> : vector<16x128xf32>
    %30 = vector.multi_reduction <maximumf>, %29, %cst_14 [1] : vector<16x6x128xf32> to vector<16x128xf32>
    %31 = vector.extract_strided_slice %24 {offsets = [0, 15, 0], sizes = [16, 6, 128], strides = [1, 1, 1]} : vector<16x32x128xf32> to vector<16x6x128xf32>
    %cst_15 = arith.constant dense<0xFF800000> : vector<16x128xf32>
    %32 = vector.multi_reduction <maximumf>, %31, %cst_15 [1] : vector<16x6x128xf32> to vector<16x128xf32>
    %33 = vector.extract_strided_slice %24 {offsets = [0, 20, 0], sizes = [16, 6, 128], strides = [1, 1, 1]} : vector<16x32x128xf32> to vector<16x6x128xf32>
    %cst_16 = arith.constant dense<0xFF800000> : vector<16x128xf32>
    %34 = vector.multi_reduction <maximumf>, %33, %cst_16 [1] : vector<16x6x128xf32> to vector<16x128xf32>
    %35 = tpu.concatenate %26, %28, %30, %32, %34 in 0 : vector<16x128xf32>, vector<16x128xf32>, vector<16x128xf32>, vector<16x128xf32>, vector<16x128xf32> -> vector<80x128xf32>
    %c0_17 = arith.constant 0 : index
    %c0_18 = arith.constant 0 : index
    %36 = vector.load %arg6[%c0_17, %c0_18] : memref<30x80xf32, #tpu.memory_space<vmem>>, vector<30x80xf32>
    %cst_19 = arith.constant dense<0.000000e+00> : vector<30x128xf32>
    %37 = tpu.matmul %36, %35, %cst_19 {dimension_numbers = #tpu.dot_dimension_numbers<[1], [0], [0], [1], [0, 0, 1, 1], [], []>} : vector<30x80xf32>, vector<80x128xf32>, vector<30x128xf32> -> vector<30x128xf32>
    %c0_20 = arith.constant 0 : index
    %c0_21 = arith.constant 0 : index
    %38 = vector.load %arg7[%c0_20, %c0_21] : memref<30x128xf32, #tpu.memory_space<vmem>>, vector<30x128xf32>
    %39 = arith.addf %37, %38 : vector<30x128xf32>
    %cst_22 = arith.constant 0.000000e+00 : f32
    %40 = vector.broadcast %cst_22 : f32 to vector<30x128xf32>
    %41 = arith.maximumf %39, %40 : vector<30x128xf32>
    %c0_23 = arith.constant 0 : index
    %c0_24 = arith.constant 0 : index
    %42 = vector.load %arg8[%c0_23, %c0_24] : memref<10x30xf32, #tpu.memory_space<vmem>>, vector<10x30xf32>
    %cst_25 = arith.constant dense<0.000000e+00> : vector<10x128xf32>
    %43 = tpu.matmul %42, %41, %cst_25 {dimension_numbers = #tpu.dot_dimension_numbers<[1], [0], [0], [1], [0, 0, 1, 1], [], []>} : vector<10x30xf32>, vector<30x128xf32>, vector<10x128xf32> -> vector<10x128xf32>
    %c0_26 = arith.constant 0 : index
    %c0_27 = arith.constant 0 : index
    %44 = vector.load %arg9[%c0_26, %c0_27] : memref<10x128xf32, #tpu.memory_space<vmem>>, vector<10x128xf32>
    %45 = arith.addf %43, %44 : vector<10x128xf32>
    %cst_28 = arith.constant 0.000000e+00 : f32
    %46 = vector.broadcast %cst_28 : f32 to vector<10x128xf32>
    %47 = arith.maximumf %45, %46 : vector<10x128xf32>
    %c0_29 = arith.constant 0 : index
    %c0_30 = arith.constant 0 : index
    %48 = vector.load %arg10[%c0_29, %c0_30] : memref<10x10xf32, #tpu.memory_space<vmem>>, vector<10x10xf32>
    %cst_31 = arith.constant dense<0.000000e+00> : vector<10x128xf32>
    %49 = tpu.matmul %48, %47, %cst_31 {dimension_numbers = #tpu.dot_dimension_numbers<[1], [0], [0], [1], [0, 0, 1, 1], [], []>} : vector<10x10xf32>, vector<10x128xf32>, vector<10x128xf32> -> vector<10x128xf32>
    %c0_32 = arith.constant 0 : index
    %c0_33 = arith.constant 0 : index
    %50 = vector.load %arg11[%c0_32, %c0_33] : memref<10x128xf32, #tpu.memory_space<vmem>>, vector<10x128xf32>
    %51 = arith.addf %49, %50 : vector<10x128xf32>
    %c0_34 = arith.constant 0 : index
    %c0_35 = arith.constant 0 : index
    %52 = vector.load %arg12[%c0_34, %c0_35] : memref<10x128xf32, #tpu.memory_space<vmem>>, vector<10x128xf32>
    tpu.vector_store %arg12[%c0_34, %c0_35], %51 {strides = array<i32>} : memref<10x128xf32, #tpu.memory_space<vmem>>, vector<10x128xf32>,
    return
  }
  func.func @transform_0(%arg0: i32) -> (i32, i32) {
    %c0_i32 = arith.constant 0 : i32
    %c0_i32_0 = arith.constant 0 : i32
    return %c0_i32, %arg0 : i32, i32
  }
  func.func @transform_1(%arg0: i32) -> (i32, i32) {
    %c0_i32 = arith.constant 0 : i32
    %c0_i32_0 = arith.constant 0 : i32
    %c0_i32_1 = arith.constant 0 : i32
    return %c0_i32, %c0_i32_0 : i32, i32
  }
  func.func @transform_2(%arg0: i32) -> (i32, i32) {
    %c0_i32 = arith.constant 0 : i32
    %c0_i32_0 = arith.constant 0 : i32
    %c0_i32_1 = arith.constant 0 : i32
    return %c0_i32, %c0_i32_0 : i32, i32
  }
  func.func @transform_3(%arg0: i32) -> (i32, i32) {
    %c0_i32 = arith.constant 0 : i32
    %c0_i32_0 = arith.constant 0 : i32
    %c0_i32_1 = arith.constant 0 : i32
    return %c0_i32, %c0_i32_0 : i32, i32
  }
  func.func @transform_4(%arg0: i32) -> (i32, i32) {
    %c0_i32 = arith.constant 0 : i32
    %c0_i32_0 = arith.constant 0 : i32
    %c0_i32_1 = arith.constant 0 : i32
    return %c0_i32, %c0_i32_0 : i32, i32
  }
  func.func @transform_5(%arg0: i32) -> (i32, i32) {
    %c0_i32 = arith.constant 0 : i32
    %c0_i32_0 = arith.constant 0 : i32
    %c0_i32_1 = arith.constant 0 : i32
    return %c0_i32, %c0_i32_0 : i32, i32
  }
  func.func @transform_6(%arg0: i32) -> (i32, i32) {
    %c0_i32 = arith.constant 0 : i32
    %c0_i32_0 = arith.constant 0 : i32
    %c0_i32_1 = arith.constant 0 : i32
    return %c0_i32, %c0_i32_0 : i32, i32
  }
  func.func @transform_7(%arg0: i32) -> (i32, i32) {
    %c0_i32 = arith.constant 0 : i32
    %c0_i32_0 = arith.constant 0 : i32
    %c0_i32_1 = arith.constant 0 : i32
    return %c0_i32, %c0_i32_0 : i32, i32
  }
  func.func @transform_8(%arg0: i32) -> (i32, i32) {
    %c0_i32 = arith.constant 0 : i32
    %c0_i32_0 = arith.constant 0 : i32
    %c0_i32_1 = arith.constant 0 : i32
    return %c0_i32, %c0_i32_0 : i32, i32
  }
  func.func @transform_9(%arg0: i32) -> (i32, i32) {
    %c0_i32 = arith.constant 0 : i32
    %c0_i32_0 = arith.constant 0 : i32
    %c0_i32_1 = arith.constant 0 : i32
    return %c0_i32, %c0_i32_0 : i32, i32
  }
  func.func @transform_10(%arg0: i32) -> (i32, i32) {
    %c0_i32 = arith.constant 0 : i32
    %c0_i32_0 = arith.constant 0 : i32
    %c0_i32_1 = arith.constant 0 : i32
    return %c0_i32, %c0_i32_0 : i32, i32
  }
  func.func @transform_11(%arg0: i32) -> (i32, i32) {
    %c0_i32 = arith.constant 0 : i32
    %c0_i32_0 = arith.constant 0 : i32
    return %c0_i32, %arg0 : i32, i32
  }
}

</mosaic_0001>

<llo_original>
// kernel: tpu_custom_call.1
$region0: #{tpu_custom_call.1}
  #allocation0 [shape = 'u32[]', space=smem, size = 0x4, offset = 0x4, fixed_abs, tag = 'smem constant byte address 0x4 - core index']
  #allocation1 [shape = 'u32[144,128]{1,0:T(1,128)}', space=vmem, size = 0x12000, scoped, tag = 'internal scratch']
  %s0 = inlined_call_operand.vmem [shape: f32[64,128], index: 0, kind: input, shape index: {}]
  %s1 = inlined_call_operand.vmem [shape: f32[384,64], index: 1, kind: input, shape index: {}]
  %s2 = inlined_call_operand.vmem [shape: f32[6,128], index: 2, kind: input, shape index: {}]
  %s3 = inlined_call_operand.vmem [shape: f32[512,192], index: 3, kind: input, shape index: {}]
  %s4 = inlined_call_operand.vmem [shape: f32[16,128], index: 4, kind: input, shape index: {}]
  %s5 = inlined_call_operand.vmem [shape: f32[30,80], index: 5, kind: input, shape index: {}]
  %s6 = inlined_call_operand.vmem [shape: f32[30,128], index: 6, kind: input, shape index: {}]
  %s7 = inlined_call_operand.vmem [shape: f32[10,30], index: 7, kind: input, shape index: {}]
  %s8 = inlined_call_operand.vmem [shape: f32[10,128], index: 8, kind: input, shape index: {}]
  %s9 = inlined_call_operand.vmem [shape: f32[10,10], index: 9, kind: input, shape index: {}]
  %s10 = inlined_call_operand.vmem [shape: f32[10,128], index: 10, kind: input, shape index: {}]
  %s11 = inlined_call_operand.hbm [shape: f32[10,128], index: 11, kind: output, shape index: {}]
  %s12 = sld [smem:[#allocation0]]
  $region54: #{tpu_custom_call.1} parent=0
    _
  %s14 = ssub.s32 1, %s12
  %s15 = scalar_select 0, %s14, %s12
  $region1: #{tpu_custom_call.1} parent=0
    #allocation2 [shape = 'u8[8192]{0}', space=vmem, size = 0x2000, scoped, tag = 'output window, operand 0, single buffered']
    #allocation3 [shape = 's32[1]{0}', space=sflag, size = 0x4, scoped, tag = 'scoped memory for tpu_custom_call.1']
    %16 = vsyncpa [#allocation3], 0
    // Predicated region
    $region2: #{tpu_custom_call.1} parent=1 // pred_check
      _
    $region3: #{tpu_custom_call.1} parent=1 // pred_check_branch
      %18 = sbr.rel (0) target = $region5
    $region4: #{tpu_custom_call.1} parent=1 // pred_region
      _
    $region5: #{tpu_custom_call.1} parent=1 // pred_fallthru
      _
    // Predicated region
    $region6: #{tpu_custom_call.1} parent=1 // pred_check
      _
    $region7: #{tpu_custom_call.1} parent=1 // pred_check_branch
      %20 = sbr.rel (0) target = $region9
    $region8: #{tpu_custom_call.1} parent=1 // pred_region
      _
    $region9: #{tpu_custom_call.1} parent=1 // pred_fallthru
      _
    // Predicated region
    $region10: #{tpu_custom_call.1} parent=1 // pred_check
      _
    $region11: #{tpu_custom_call.1} parent=1 // pred_check_branch
      %22 = sbr.rel (0) target = $region13
    $region12: #{tpu_custom_call.1} parent=1 // pred_region
      _
    $region13: #{tpu_custom_call.1} parent=1 // pred_fallthru
      _
    // Predicated region
    $region14: #{tpu_custom_call.1} parent=1 // pred_check
      _
    $region15: #{tpu_custom_call.1} parent=1 // pred_check_branch
      %24 = sbr.rel (0) target = $region17
    $region16: #{tpu_custom_call.1} parent=1 // pred_region
      _
    $region17: #{tpu_custom_call.1} parent=1 // pred_fallthru
      _
    // Predicated region
    $region18: #{tpu_custom_call.1} parent=1 // pred_check
      _
    $region19: #{tpu_custom_call.1} parent=1 // pred_check_branch
      %26 = sbr.rel (0) target = $region21
    $region20: #{tpu_custom_call.1} parent=1 // pred_region
      _
    $region21: #{tpu_custom_call.1} parent=1 // pred_fallthru
      _
    // Predicated region
    $region22: #{tpu_custom_call.1} parent=1 // pred_check
      _
    $region23: #{tpu_custom_call.1} parent=1 // pred_check_branch
      %28 = sbr.rel (0) target = $region25
    $region24: #{tpu_custom_call.1} parent=1 // pred_region
      _
    $region25: #{tpu_custom_call.1} parent=1 // pred_fallthru
      _
    // Predicated region
    $region26: #{tpu_custom_call.1} parent=1 // pred_check
      _
    $region27: #{tpu_custom_call.1} parent=1 // pred_check_branch
      %30 = sbr.rel (0) target = $region29
    $region28: #{tpu_custom_call.1} parent=1 // pred_region
      _
    $region29: #{tpu_custom_call.1} parent=1 // pred_fallthru
      _
    // Predicated region
    $region30: #{tpu_custom_call.1} parent=1 // pred_check
      _
    $region31: #{tpu_custom_call.1} parent=1 // pred_check_branch
      %32 = sbr.rel (0) target = $region33
    $region32: #{tpu_custom_call.1} parent=1 // pred_region
      _
    $region33: #{tpu_custom_call.1} parent=1 // pred_fallthru
      _
    // Predicated region
    $region34: #{tpu_custom_call.1} parent=1 // pred_check
      _
    $region35: #{tpu_custom_call.1} parent=1 // pred_check_branch
      %34 = sbr.rel (0) target = $region37
    $region36: #{tpu_custom_call.1} parent=1 // pred_region
      _
    $region37: #{tpu_custom_call.1} parent=1 // pred_fallthru
      _
    // Predicated region
    $region38: #{tpu_custom_call.1} parent=1 // pred_check
      _
    $region39: #{tpu_custom_call.1} parent=1 // pred_check_branch
      %36 = sbr.rel (0) target = $region41
    $region40: #{tpu_custom_call.1} parent=1 // pred_region
      _
    $region41: #{tpu_custom_call.1} parent=1 // pred_fallthru
      _
    // Predicated region
    $region42: #{tpu_custom_call.1} parent=1 // pred_check
      _
    $region43: #{tpu_custom_call.1} parent=1 // pred_check_branch
      %38 = sbr.rel (0) target = $region45
    $region44: #{tpu_custom_call.1} parent=1 // pred_region
      _
    $region45: #{tpu_custom_call.1} parent=1 // pred_fallthru
      _
    %v39 = vld [vmem:[%s1] sm:$0xff]
    %v40 = vld [vmem:[%s1 + $0x8] sm:$0xff]
    %v41 = vld [vmem:[%s1 + $0x10] sm:$0xff]
    %v42 = vld [vmem:[%s1 + $0x18] sm:$0xff]
    %v43 = vld [vmem:[%s1 + $0x20] sm:$0xff]
    %v44 = vld [vmem:[%s1 + $0x28] sm:$0xff]
    %v45 = vld [vmem:[%s1 + $0x30] sm:$0xff]
    %v46 = vld [vmem:[%s1 + $0x38] sm:$0xff]
    %v47 = vld [vmem:[%s1 + $0x40] sm:$0xff]
    %v48 = vld [vmem:[%s1 + $0x48] sm:$0xff]
    %v49 = vld [vmem:[%s1 + $0x50] sm:$0xff]
    %v50 = vld [vmem:[%s1 + $0x58] sm:$0xff]
    %v51 = vld [vmem:[%s1 + $0x60] sm:$0xff]
    %v52 = vld [vmem:[%s1 + $0x68] sm:$0xff]
    %v53 = vld [vmem:[%s1 + $0x70] sm:$0xff]
    %v54 = vld [vmem:[%s1 + $0x78] sm:$0xff]
    %v55 = vld [vmem:[%s1 + $0x80] sm:$0xff]
    %v56 = vld [vmem:[%s1 + $0x88] sm:$0xff]
    %v57 = vld [vmem:[%s1 + $0x90] sm:$0xff]
    %v58 = vld [vmem:[%s1 + $0x98] sm:$0xff]
    %v59 = vld [vmem:[%s1 + $0xa0] sm:$0xff]
    %v60 = vld [vmem:[%s1 + $0xa8] sm:$0xff]
    %v61 = vld [vmem:[%s1 + $0xb0] sm:$0xff]
    %v62 = vld [vmem:[%s1 + $0xb8] sm:$0xff]
    %v63 = vld [vmem:[%s1 + $0xc0] sm:$0xff]
    %v64 = vld [vmem:[%s1 + $0xc8] sm:$0xff]
    %v65 = vld [vmem:[%s1 + $0xd0] sm:$0xff]
    %v66 = vld [vmem:[%s1 + $0xd8] sm:$0xff]
    %v67 = vld [vmem:[%s1 + $0xe0] sm:$0xff]
    %v68 = vld [vmem:[%s1 + $0xe8] sm:$0xff]
    %v69 = vld [vmem:[%s1 + $0xf0] sm:$0xff]
    %v70 = vld [vmem:[%s1 + $0xf8] sm:$0xff]
    %v71 = vld [vmem:[%s1 + $0x100] sm:$0xff]
    %v72 = vld [vmem:[%s1 + $0x108] sm:$0xff]
    %v73 = vld [vmem:[%s1 + $0x110] sm:$0xff]
    %v74 = vld [vmem:[%s1 + $0x118] sm:$0xff]
    %v75 = vld [vmem:[%s1 + $0x120] sm:$0xff]
    %v76 = vld [vmem:[%s1 + $0x128] sm:$0xff]
    %v77 = vld [vmem:[%s1 + $0x130] sm:$0xff]
    %v78 = vld [vmem:[%s1 + $0x138] sm:$0xff]
    %v79 = vld [vmem:[%s1 + $0x140] sm:$0xff]
    %v80 = vld [vmem:[%s1 + $0x148] sm:$0xff]
    %v81 = vld [vmem:[%s1 + $0x150] sm:$0xff]
    %v82 = vld [vmem:[%s1 + $0x158] sm:$0xff]
    %v83 = vld [vmem:[%s1 + $0x160] sm:$0xff]
    %v84 = vld [vmem:[%s1 + $0x168] sm:$0xff]
    %v85 = vld [vmem:[%s1 + $0x170] sm:$0xff]
    %v86 = vld [vmem:[%s1 + $0x178] sm:$0xff]
    %v87 = vld [vmem:[%s0] sm:$0xff]
    %v88 = vld [vmem:[%s0 + $0x8] sm:$0xff]
    %v89 = vld [vmem:[%s0 + $0x10] sm:$0xff]
    %v90 = vld [vmem:[%s0 + $0x18] sm:$0xff]
    %v91 = vld [vmem:[%s0 + $0x20] sm:$0xff]
    %v92 = vld [vmem:[%s0 + $0x28] sm:$0xff]
    %v93 = vld [vmem:[%s0 + $0x30] sm:$0xff]
    %v94 = vld [vmem:[%s0 + $0x38] sm:$0xff]
    %vm95 = vcmask 523264
    %v97 = vsel %vm95, %v39, 0
    %v100 = vsel %vm95, %v40, 0
    %v103 = vsel %vm95, %v41, 0
    %v106 = vsel %vm95, %v42, 0
    %v109 = vsel %vm95, %v43, 0
    %v112 = vsel %vm95, %v44, 0
    %v115 = vsel %vm95, %v45, 0
    %v118 = vsel %vm95, %v46, 0
    %v121 = vsel %vm95, %v47, 0
    %v124 = vsel %vm95, %v48, 0
    %v127 = vsel %vm95, %v49, 0
    %v130 = vsel %vm95, %v50, 0
    %v133 = vsel %vm95, %v51, 0
    %v136 = vsel %vm95, %v52, 0
    %v139 = vsel %vm95, %v53, 0
    %v142 = vsel %vm95, %v54, 0
    %v145 = vsel %vm95, %v55, 0
    %v148 = vsel %vm95, %v56, 0
    %v151 = vsel %vm95, %v57, 0
    %v154 = vsel %vm95, %v58, 0
    %v157 = vsel %vm95, %v59, 0
    %v160 = vsel %vm95, %v60, 0
    %v163 = vsel %vm95, %v61, 0
    %v166 = vsel %vm95, %v62, 0
    %v169 = vsel %vm95, %v63, 0
    %v172 = vsel %vm95, %v64, 0
    %v175 = vsel %vm95, %v65, 0
    %v178 = vsel %vm95, %v66, 0
    %v181 = vsel %vm95, %v67, 0
    %v184 = vsel %vm95, %v68, 0
    %v187 = vsel %vm95, %v69, 0
    %v190 = vsel %vm95, %v70, 0
    %v193 = vsel %vm95, %v71, 0
    %v196 = vsel %vm95, %v72, 0
    %v199 = vsel %vm95, %v73, 0
    %v202 = vsel %vm95, %v74, 0
    %v205 = vsel %vm95, %v75, 0
    %v208 = vsel %vm95, %v76, 0
    %v211 = vsel %vm95, %v77, 0
    %v214 = vsel %vm95, %v78, 0
    %v217 = vsel %vm95, %v79, 0
    %v220 = vsel %vm95, %v80, 0
    %v223 = vsel %vm95, %v81, 0
    %v226 = vsel %vm95, %v82, 0
    %v229 = vsel %vm95, %v83, 0
    %v232 = vsel %vm95, %v84, 0
    %v235 = vsel %vm95, %v85, 0
    %v238 = vsel %vm95, %v86, 0
    %240 = vmatprep.subr.mxu0 0.0
    %241 = vmatpush1.msra.mxu0 %v87
    %242 = vmatprep.subr.mxu0 0.0
    %243 = vmatpush1.msra.mxu0 %v88
    %244 = vmatprep.subr.mxu0 0.0
    %245 = vmatpush1.msra.mxu0 %v89
    %246 = vmatprep.subr.mxu0 0.0
    %247 = vmatpush1.msra.mxu0 %v90
    %248 = vmatprep.subr.mxu0 0.0
    %249 = vmatpush1.msra.mxu0 %v91
    %250 = vmatprep.subr.mxu0 0.0
    %251 = vmatpush1.msra.mxu0 %v92
    %252 = vmatprep.subr.mxu0 0.0
    %253 = vmatpush1.msra.mxu0 %v93
    %254 = vmatprep.subr.mxu0 0.0
    %255 = vmatpush1.msra.mxu0 %v94
    %256 = vmatprep.subr.mxu0 0.0
    %257 = vmatpush1.msra.mxu0 0.0
    %258 = vmatprep.subr.mxu0 0.0
    %259 = vmatpush1.msra.mxu0 0.0
    %260 = vmatprep.subr.mxu0 0.0
    %261 = vmatpush1.msra.mxu0 0.0
    %262 = vmatprep.subr.mxu0 0.0
    %263 = vmatpush1.msra.mxu0 0.0
    %264 = vmatprep.subr.mxu0 0.0
    %265 = vmatpush1.msra.mxu0 0.0
    %266 = vmatprep.subr.mxu0 0.0
    %267 = vmatpush1.msra.mxu0 0.0
    %268 = vmatprep.subr.mxu0 0.0
    %269 = vmatpush1.msra.mxu0 0.0
    %270 = vmatprep.subr.mxu0 0.0
    %271 = vmatpush1.msra.mxu0 0.0
    %272 = vmatprep.subr.mxu0 0.0
    %273 = vmatpush1.msra.mxu0 0.0
    %274 = vmatprep.subr.mxu0 0.0
    %275 = vmatpush1.msra.mxu0 0.0
    %276 = vmatprep.subr.mxu0 0.0
    %277 = vmatpush1.msra.mxu0 0.0
    %278 = vmatprep.subr.mxu0 0.0
    %279 = vmatpush1.msra.mxu0 0.0
    %280 = vmatprep.subr.mxu0 0.0
    %281 = vmatpush1.msra.mxu0 0.0
    %282 = vmatprep.subr.mxu0 0.0
    %283 = vmatpush1.msra.mxu0 0.0
    %284 = vmatprep.subr.mxu0 0.0
    %285 = vmatpush1.msra.mxu0 0.0
    %286 = vmatprep.subr.mxu0 0.0
    %287 = vmatpush1.msra.mxu0 0.0
    %288 = vmatprep.subr.mxu0 0.0
    %289 = vmatpush1.msra.mxu0 0.0
    %290 = vmatprep.subr.mxu0 0.0
    %291 = vmatpush1.msra.mxu0 0.0
    %292 = vmatprep.subr.mxu0 0.0
    %293 = vmatpush1.msra.mxu0 0.0
    %294 = vmatprep.subr.mxu0 0.0
    %295 = vmatpush1.msra.mxu0 0.0
    %296 = vmatprep.subr.mxu0 0.0
    %297 = vmatpush1.msra.mxu0 0.0
    %298 = vmatprep.subr.mxu0 0.0
    %299 = vmatpush1.msra.mxu0 0.0
    %300 = vmatprep.subr.mxu0 0.0
    %301 = vmatpush1.msra.mxu0 0.0
    %302 = vmatprep.subr.mxu0 0.0
    %303 = vmatpush1.msra.mxu0 0.0
    %304 = vmatprep.mubr.f32.mxu0 0.0
    %305 = vmatmul.mubr.f32.gmra.mrb[0].mxu0 %v97
    %v306 = vpop.f32.mrb[0].mxu0
    %v307 = vadd.f32 0.0, %v306
    %v308 = vpop.f32.mrb[0].mxu0
    %309 = vmatprep.mubr.f32.mxu0 0.0
    %310 = vmatmul.mubr.f32.gmra.mrb[0].mxu0 %v100
    %v311 = vpop.f32.mrb[0].mxu0
    %v312 = vadd.f32 0.0, %v311
    %v313 = vpop.f32.mrb[0].mxu0
    %314 = vmatprep.mubr.f32.mxu0 0.0
    %315 = vmatmul.mubr.f32.gmra.mrb[0].mxu0 %v103
    %v316 = vpop.f32.mrb[0].mxu0
    %v317 = vadd.f32 0.0, %v316
    %v318 = vpop.f32.mrb[0].mxu0
    %319 = vmatprep.mubr.f32.mxu0 0.0
    %320 = vmatmul.mubr.f32.gmra.mrb[0].mxu0 %v106
    %v321 = vpop.f32.mrb[0].mxu0
    %v322 = vadd.f32 0.0, %v321
    %v323 = vpop.f32.mrb[0].mxu0
    %324 = vmatprep.mubr.f32.mxu0 0.0
    %325 = vmatmul.mubr.f32.gmra.mrb[0].mxu0 %v109
    %v326 = vpop.f32.mrb[0].mxu0
    %v327 = vadd.f32 0.0, %v326
    %v328 = vpop.f32.mrb[0].mxu0
    %329 = vmatprep.mubr.f32.mxu0 0.0
    %330 = vmatmul.mubr.f32.gmra.mrb[0].mxu0 %v112
    %v331 = vpop.f32.mrb[0].mxu0
    %v332 = vadd.f32 0.0, %v331
    %v333 = vpop.f32.mrb[0].mxu0
    %334 = vmatprep.mubr.f32.mxu0 0.0
    %335 = vmatmul.mubr.f32.gmra.mrb[0].mxu0 %v115
    %v336 = vpop.f32.mrb[0].mxu0
    %v337 = vadd.f32 0.0, %v336
    %v338 = vpop.f32.mrb[0].mxu0
    %339 = vmatprep.mubr.f32.mxu0 0.0
    %340 = vmatmul.mubr.f32.gmra.mrb[0].mxu0 %v118
    %v341 = vpop.f32.mrb[0].mxu0
    %v342 = vadd.f32 0.0, %v341
    %v343 = vpop.f32.mrb[0].mxu0
    %344 = vmatprep.mubr.f32.mxu0 0.0
    %345 = vmatmul.mubr.f32.gmra.mrb[0].mxu0 %v121
    %v346 = vpop.f32.mrb[0].mxu0
    %v347 = vadd.f32 0.0, %v346
    %v348 = vpop.f32.mrb[0].mxu0
    %349 = vmatprep.mubr.f32.mxu0 0.0
    %350 = vmatmul.mubr.f32.gmra.mrb[0].mxu0 %v124
    %v351 = vpop.f32.mrb[0].mxu0
    %v352 = vadd.f32 0.0, %v351
    %v353 = vpop.f32.mrb[0].mxu0
    %354 = vmatprep.mubr.f32.mxu0 0.0
    %355 = vmatmul.mubr.f32.gmra.mrb[0].mxu0 %v127
    %v356 = vpop.f32.mrb[0].mxu0
    %v357 = vadd.f32 0.0, %v356
    %v358 = vpop.f32.mrb[0].mxu0
    %359 = vmatprep.mubr.f32.mxu0 0.0
    %360 = vmatmul.mubr.f32.gmra.mrb[0].mxu0 %v130
    %v361 = vpop.f32.mrb[0].mxu0
    %v362 = vadd.f32 0.0, %v361
    %v363 = vpop.f32.mrb[0].mxu0
    %364 = vmatprep.mubr.f32.mxu0 0.0
    %365 = vmatmul.mubr.f32.gmra.mrb[0].mxu0 %v133
    %v366 = vpop.f32.mrb[0].mxu0
    %v367 = vadd.f32 0.0, %v366
    %v368 = vpop.f32.mrb[0].mxu0
    %369 = vmatprep.mubr.f32.mxu0 0.0
    %370 = vmatmul.mubr.f32.gmra.mrb[0].mxu0 %v136
    %v371 = vpop.f32.mrb[0].mxu0
    %v372 = vadd.f32 0.0, %v371
    %v373 = vpop.f32.mrb[0].mxu0
    %374 = vmatprep.mubr.f32.mxu0 0.0
    %375 = vmatmul.mubr.f32.gmra.mrb[0].mxu0 %v139
    %v376 = vpop.f32.mrb[0].mxu0
    %v377 = vadd.f32 0.0, %v376
    %v378 = vpop.f32.mrb[0].mxu0
    %379 = vmatprep.mubr.f32.mxu0 0.0
    %380 = vmatmul.mubr.f32.gmra.mrb[0].mxu0 %v142
    %v381 = vpop.f32.mrb[0].mxu0
    %v382 = vadd.f32 0.0, %v381
    %v383 = vpop.f32.mrb[0].mxu0
    %384 = vmatprep.mubr.f32.mxu0 0.0
    %385 = vmatmul.mubr.f32.gmra.mrb[0].mxu0 %v145
    %v386 = vpop.f32.mrb[0].mxu0
    %v387 = vadd.f32 0.0, %v386
    %v388 = vpop.f32.mrb[0].mxu0
    %389 = vmatprep.mubr.f32.mxu0 0.0
    %390 = vmatmul.mubr.f32.gmra.mrb[0].mxu0 %v148
    %v391 = vpop.f32.mrb[0].mxu0
    %v392 = vadd.f32 0.0, %v391
    %v393 = vpop.f32.mrb[0].mxu0
    %394 = vmatprep.mubr.f32.mxu0 0.0
    %395 = vmatmul.mubr.f32.gmra.mrb[0].mxu0 %v151
    %v396 = vpop.f32.mrb[0].mxu0
    %v397 = vadd.f32 0.0, %v396
    %v398 = vpop.f32.mrb[0].mxu0
    %399 = vmatprep.mubr.f32.mxu0 0.0
    %400 = vmatmul.mubr.f32.gmra.mrb[0].mxu0 %v154
    %v401 = vpop.f32.mrb[0].mxu0
    %v402 = vadd.f32 0.0, %v401
    %v403 = vpop.f32.mrb[0].mxu0
    %404 = vmatprep.mubr.f32.mxu0 0.0
    %405 = vmatmul.mubr.f32.gmra.mrb[0].mxu0 %v157
    %v406 = vpop.f32.mrb[0].mxu0
    %v407 = vadd.f32 0.0, %v406
    %v408 = vpop.f32.mrb[0].mxu0
    %409 = vmatprep.mubr.f32.mxu0 0.0
    %410 = vmatmul.mubr.f32.gmra.mrb[0].mxu0 %v160
    %v411 = vpop.f32.mrb[0].mxu0
    %v412 = vadd.f32 0.0, %v411
    %v413 = vpop.f32.mrb[0].mxu0
    %414 = vmatprep.mubr.f32.mxu0 0.0
    %415 = vmatmul.mubr.f32.gmra.mrb[0].mxu0 %v163
    %v416 = vpop.f32.mrb[0].mxu0
    %v417 = vadd.f32 0.0, %v416
    %v418 = vpop.f32.mrb[0].mxu0
    %419 = vmatprep.mubr.f32.mxu0 0.0
    %420 = vmatmul.mubr.f32.gmra.mrb[0].mxu0 %v166
    %v421 = vpop.f32.mrb[0].mxu0
    %v422 = vadd.f32 0.0, %v421
    %v423 = vpop.f32.mrb[0].mxu0
    %424 = vmatprep.mubr.f32.mxu0 0.0
    %425 = vmatmul.mubr.f32.gmra.mrb[0].mxu0 %v169
    %v426 = vpop.f32.mrb[0].mxu0
    %v427 = vadd.f32 0.0, %v426
    %v428 = vpop.f32.mrb[0].mxu0
    %429 = vmatprep.mubr.f32.mxu0 0.0
    %430 = vmatmul.mubr.f32.gmra.mrb[0].mxu0 %v172
    %v431 = vpop.f32.mrb[0].mxu0
    %v432 = vadd.f32 0.0, %v431
    %v433 = vpop.f32.mrb[0].mxu0
    %434 = vmatprep.mubr.f32.mxu0 0.0
    %435 = vmatmul.mubr.f32.gmra.mrb[0].mxu0 %v175
    %v436 = vpop.f32.mrb[0].mxu0
    %v437 = vadd.f32 0.0, %v436
    %v438 = vpop.f32.mrb[0].mxu0
    %439 = vmatprep.mubr.f32.mxu0 0.0
    %440 = vmatmul.mubr.f32.gmra.mrb[0].mxu0 %v178
    %v441 = vpop.f32.mrb[0].mxu0
    %v442 = vadd.f32 0.0, %v441
    %v443 = vpop.f32.mrb[0].mxu0
    %444 = vmatprep.mubr.f32.mxu0 0.0
    %445 = vmatmul.mubr.f32.gmra.mrb[0].mxu0 %v181
    %v446 = vpop.f32.mrb[0].mxu0
    %v447 = vadd.f32 0.0, %v446
    %v448 = vpop.f32.mrb[0].mxu0
    %449 = vmatprep.mubr.f32.mxu0 0.0
    %450 = vmatmul.mubr.f32.gmra.mrb[0].mxu0 %v184
    %v451 = vpop.f32.mrb[0].mxu0
    %v452 = vadd.f32 0.0, %v451
    %v453 = vpop.f32.mrb[0].mxu0
    %454 = vmatprep.mubr.f32.mxu0 0.0
    %455 = vmatmul.mubr.f32.gmra.mrb[0].mxu0 %v187
    %v456 = vpop.f32.mrb[0].mxu0
    %v457 = vadd.f32 0.0, %v456
    %v458 = vpop.f32.mrb[0].mxu0
    %459 = vmatprep.mubr.f32.mxu0 0.0
    %460 = vmatmul.mubr.f32.gmra.mrb[0].mxu0 %v190
    %v461 = vpop.f32.mrb[0].mxu0
    %v462 = vadd.f32 0.0, %v461
    %v463 = vpop.f32.mrb[0].mxu0
    %464 = vmatprep.mubr.f32.mxu0 0.0
    %465 = vmatmul.mubr.f32.gmra.mrb[0].mxu0 %v193
    %v466 = vpop.f32.mrb[0].mxu0
    %v467 = vadd.f32 0.0, %v466
    %v468 = vpop.f32.mrb[0].mxu0
    %469 = vmatprep.mubr.f32.mxu0 0.0
    %470 = vmatmul.mubr.f32.gmra.mrb[0].mxu0 %v196
    %v471 = vpop.f32.mrb[0].mxu0
    %v472 = vadd.f32 0.0, %v471
    %v473 = vpop.f32.mrb[0].mxu0
    %474 = vmatprep.mubr.f32.mxu0 0.0
    %475 = vmatmul.mubr.f32.gmra.mrb[0].mxu0 %v199
    %v476 = vpop.f32.mrb[0].mxu0
    %v477 = vadd.f32 0.0, %v476
    %v478 = vpop.f32.mrb[0].mxu0
    %479 = vmatprep.mubr.f32.mxu0 0.0
    %480 = vmatmul.mubr.f32.gmra.mrb[0].mxu0 %v202
    %v481 = vpop.f32.mrb[0].mxu0
    %v482 = vadd.f32 0.0, %v481
    %v483 = vpop.f32.mrb[0].mxu0
    %484 = vmatprep.mubr.f32.mxu0 0.0
    %485 = vmatmul.mubr.f32.gmra.mrb[0].mxu0 %v205
    %v486 = vpop.f32.mrb[0].mxu0
    %v487 = vadd.f32 0.0, %v486
    %v488 = vpop.f32.mrb[0].mxu0
    %489 = vmatprep.mubr.f32.mxu0 0.0
    %490 = vmatmul.mubr.f32.gmra.mrb[0].mxu0 %v208
    %v491 = vpop.f32.mrb[0].mxu0
    %v492 = vadd.f32 0.0, %v491
    %v493 = vpop.f32.mrb[0].mxu0
    %494 = vmatprep.mubr.f32.mxu0 0.0
    %495 = vmatmul.mubr.f32.gmra.mrb[0].mxu0 %v211
    %v496 = vpop.f32.mrb[0].mxu0
    %v497 = vadd.f32 0.0, %v496
    %v498 = vpop.f32.mrb[0].mxu0
    %499 = vmatprep.mubr.f32.mxu0 0.0
    %500 = vmatmul.mubr.f32.gmra.mrb[0].mxu0 %v214
    %v501 = vpop.f32.mrb[0].mxu0
    %v502 = vadd.f32 0.0, %v501
    %v503 = vpop.f32.mrb[0].mxu0
    %504 = vmatprep.mubr.f32.mxu0 0.0
    %505 = vmatmul.mubr.f32.gmra.mrb[0].mxu0 %v217
    %v506 = vpop.f32.mrb[0].mxu0
    %v507 = vadd.f32 0.0, %v506
    %v508 = vpop.f32.mrb[0].mxu0
    %509 = vmatprep.mubr.f32.mxu0 0.0
    %510 = vmatmul.mubr.f32.gmra.mrb[0].mxu0 %v220
    %v511 = vpop.f32.mrb[0].mxu0
    %v512 = vadd.f32 0.0, %v511
    %v513 = vpop.f32.mrb[0].mxu0
    %514 = vmatprep.mubr.f32.mxu0 0.0
    %515 = vmatmul.mubr.f32.gmra.mrb[0].mxu0 %v223
    %v516 = vpop.f32.mrb[0].mxu0
    %v517 = vadd.f32 0.0, %v516
    %v518 = vpop.f32.mrb[0].mxu0
    %519 = vmatprep.mubr.f32.mxu0 0.0
    %520 = vmatmul.mubr.f32.gmra.mrb[0].mxu0 %v226
    %v521 = vpop.f32.mrb[0].mxu0
    %v522 = vadd.f32 0.0, %v521
    %v523 = vpop.f32.mrb[0].mxu0
    %524 = vmatprep.mubr.f32.mxu0 0.0
    %525 = vmatmul.mubr.f32.gmra.mrb[0].mxu0 %v229
    %v526 = vpop.f32.mrb[0].mxu0
    %v527 = vadd.f32 0.0, %v526
    %v528 = vpop.f32.mrb[0].mxu0
    %529 = vmatprep.mubr.f32.mxu0 0.0
    %530 = vmatmul.mubr.f32.gmra.mrb[0].mxu0 %v232
    %v531 = vpop.f32.mrb[0].mxu0
    %v532 = vadd.f32 0.0, %v531
    %v533 = vpop.f32.mrb[0].mxu0
    %534 = vmatprep.mubr.f32.mxu0 0.0
    %535 = vmatmul.mubr.f32.gmra.mrb[0].mxu0 %v235
    %v536 = vpop.f32.mrb[0].mxu0
    %v537 = vadd.f32 0.0, %v536
    %v538 = vpop.f32.mrb[0].mxu0
    %539 = vmatprep.mubr.f32.mxu0 0.0
    %540 = vmatmul.mubr.f32.gmra.mrb[0].mxu0 %v238
    %v541 = vpop.f32.mrb[0].mxu0
    %v542 = vadd.f32 0.0, %v541
    %v543 = vpop.f32.mrb[0].mxu0
    %544 = vdwg.mxu0
    %v545 = vmax.f32 %v307, %v327
    %v546 = vmax.f32 %v312, %v332
    %v547 = vmax.f32 %v317, %v337
    %v548 = vmax.f32 %v322, %v342
    %v549 = vmax.f32 %v347, %v367
    %v550 = vmax.f32 %v352, %v372
    %v551 = vmax.f32 %v357, %v377
    %v552 = vmax.f32 %v362, %v382
    %v553 = vmax.f32 %v387, %v407
    %v554 = vmax.f32 %v392, %v412
    %v555 = vmax.f32 %v397, %v417
    %v556 = vmax.f32 %v402, %v422
    %v557 = vmax.f32 %v427, %v447
    %v558 = vmax.f32 %v432, %v452
    %v559 = vmax.f32 %v437, %v457
    %v560 = vmax.f32 %v442, %v462
    %v561 = vmax.f32 %v467, %v487
    %v562 = vmax.f32 %v472, %v492
    %v563 = vmax.f32 %v477, %v497
    %v564 = vmax.f32 %v482, %v502
    %v565 = vmax.f32 %v507, %v527
    %v566 = vmax.f32 %v512, %v532
    %v567 = vmax.f32 %v517, %v537
    %v568 = vmax.f32 %v522, %v542
    %v569 = vld [vmem:[%s2] sm:$0x3f]
    %v571 = vcombine.high %v569, %v569
    %v573 = vunpack.c.l.s4 1966171168
    %v574 = vunpack.c.0.s8 %v573
    %v575 = vlaneseq
    %v576 = vshrl.u32 %v575, 7
    %v577 = vsub.s32 %v574, %v576
    %v578 = vrot.slane %v569, %v577
    %v580 = vunpack.c.l.s4 1966171168
    %v581 = vunpack.c.0.s8 %v580
    %v582 = vlaneseq
    %v583 = vshrl.u32 %v582, 7
    %v584 = vsub.s32 %v581, %v583
    %v585 = vrot.slane %v571, %v584
    %v586 = vcombine.high %v578, %v578
    %v587 = vcombine.high %v585, %v585
    %v589 = vunpack.c.l.s4 1966171168
    %v590 = vunpack.c.0.s8 %v589
    %v591 = vlaneseq
    %v592 = vshrl.u32 %v591, 7
    %v593 = vsub.s32 %v590, %v592
    %v594 = vrot.slane %v578, %v593
    %v596 = vunpack.c.l.s4 1966171168
    %v597 = vunpack.c.0.s8 %v596
    %v598 = vlaneseq
    %v599 = vshrl.u32 %v598, 7
    %v600 = vsub.s32 %v597, %v599
    %v601 = vrot.slane %v585, %v600
    %v603 = vunpack.c.l.s4 1966171168
    %v604 = vunpack.c.0.s8 %v603
    %v605 = vlaneseq
    %v606 = vshrl.u32 %v605, 7
    %v607 = vsub.s32 %v604, %v606
    %v608 = vrot.slane %v586, %v607
    %v610 = vunpack.c.l.s4 1966171168
    %v611 = vunpack.c.0.s8 %v610
    %v612 = vlaneseq
    %v613 = vshrl.u32 %v612, 7
    %v614 = vsub.s32 %v611, %v613
    %v615 = vrot.slane %v587, %v614
    %v616 = vcombine.high %v594, %v594
    %v617 = vcombine.high %v608, %v608
    %v618 = vlaneseq
    %v619 = vshrl.u32 %v618, 7
    %v620 = vsub.s32 0, %v619
    %v621 = vrot.slane %v594, %v620
    %v622 = vlaneseq
    %v623 = vshrl.u32 %v622, 7
    %v624 = vsub.s32 0, %v623
    %v625 = vrot.slane %v608, %v624
    %v626 = vlaneseq
    %v627 = vshrl.u32 %v626, 7
    %v628 = vsub.s32 0, %v627
    %v629 = vrot.slane %v616, %v628
    %v630 = vlaneseq
    %v631 = vshrl.u32 %v630, 7
    %v632 = vsub.s32 0, %v631
    %v633 = vrot.slane %v617, %v632
    %v634 = vlaneseq
    %v635 = vshrl.u32 %v634, 7
    %v636 = vsub.s32 0, %v635
    %v637 = vrot.slane %v601, %v636
    %v638 = vlaneseq
    %v639 = vshrl.u32 %v638, 7
    %v640 = vsub.s32 0, %v639
    %v641 = vrot.slane %v615, %v640
    %v648 = vadd.f32 %v545, %v621
    %v649 = vadd.f32 %v546, %v621
    %v650 = vadd.f32 %v547, %v621
    %v651 = vadd.f32 %v548, %v621
    %v652 = vadd.f32 %v549, %v625
    %v653 = vadd.f32 %v550, %v625
    %v654 = vadd.f32 %v551, %v625
    %v655 = vadd.f32 %v552, %v625
    %v656 = vadd.f32 %v553, %v629
    %v657 = vadd.f32 %v554, %v629
    %v658 = vadd.f32 %v555, %v629
    %v659 = vadd.f32 %v556, %v629
    %v660 = vadd.f32 %v557, %v633
    %v661 = vadd.f32 %v558, %v633
    %v662 = vadd.f32 %v559, %v633
    %v663 = vadd.f32 %v560, %v633
    %v664 = vadd.f32 %v561, %v637
    %v665 = vadd.f32 %v562, %v637
    %v666 = vadd.f32 %v563, %v637
    %v667 = vadd.f32 %v564, %v637
    %v668 = vadd.f32 %v565, %v641
    %v669 = vadd.f32 %v566, %v641
    %v670 = vadd.f32 %v567, %v641
    %v671 = vadd.f32 %v568, %v641
    %v672 = vmax.f32 %v648, 0.0
    %v673 = vmax.f32 %v649, 0.0
    %v674 = vmax.f32 %v650, 0.0
    %v675 = vmax.f32 %v651, 0.0
    %v676 = vmax.f32 %v652, 0.0
    %v677 = vmax.f32 %v653, 0.0
    %v678 = vmax.f32 %v654, 0.0
    %v679 = vmax.f32 %v655, 0.0
    %v680 = vmax.f32 %v656, 0.0
    %v681 = vmax.f32 %v657, 0.0
    %v682 = vmax.f32 %v658, 0.0
    %v683 = vmax.f32 %v659, 0.0
    %v684 = vmax.f32 %v660, 0.0
    %v685 = vmax.f32 %v661, 0.0
    %v686 = vmax.f32 %v662, 0.0
    %v687 = vmax.f32 %v663, 0.0
    %v688 = vmax.f32 %v664, 0.0
    %v689 = vmax.f32 %v665, 0.0
    %v690 = vmax.f32 %v666, 0.0
    %v691 = vmax.f32 %v667, 0.0
    %v692 = vmax.f32 %v668, 0.0
    %v693 = vmax.f32 %v669, 0.0
    %v694 = vmax.f32 %v670, 0.0
    %v695 = vmax.f32 %v671, 0.0
    %v696 = vld [vmem:[%s3] sm:$0xff]
    %v697 = vld [vmem:[%s3 + $0x8] sm:$0xff]
    %v698 = vld [vmem:[%s3 + $0x10] sm:$0xff]
    %v699 = vld [vmem:[%s3 + $0x18] sm:$0xff]
    %v700 = vld [vmem:[%s3 + $0x20] sm:$0xff]
    %v701 = vld [vmem:[%s3 + $0x28] sm:$0xff]
    %v702 = vld [vmem:[%s3 + $0x30] sm:$0xff]
    %v703 = vld [vmem:[%s3 + $0x38] sm:$0xff]
    %v704 = vld [vmem:[%s3 + $0x40] sm:$0xff]
    %v705 = vld [vmem:[%s3 + $0x48] sm:$0xff]
    %v706 = vld [vmem:[%s3 + $0x50] sm:$0xff]
    %v707 = vld [vmem:[%s3 + $0x58] sm:$0xff]
    %v708 = vld [vmem:[%s3 + $0x60] sm:$0xff]
    %v709 = vld [vmem:[%s3 + $0x68] sm:$0xff]
    %v710 = vld [vmem:[%s3 + $0x70] sm:$0xff]
    %v711 = vld [vmem:[%s3 + $0x78] sm:$0xff]
    %v712 = vld [vmem:[%s3 + $0x80] sm:$0xff]
    %v713 = vld [vmem:[%s3 + $0x88] sm:$0xff]
    %v714 = vld [vmem:[%s3 + $0x90] sm:$0xff]
    %v715 = vld [vmem:[%s3 + $0x98] sm:$0xff]
    %v716 = vld [vmem:[%s3 + $0xa0] sm:$0xff]
    %v717 = vld [vmem:[%s3 + $0xa8] sm:$0xff]
    %v718 = vld [vmem:[%s3 + $0xb0] sm:$0xff]
    %v719 = vld [vmem:[%s3 + $0xb8] sm:$0xff]
    %v720 = vld [vmem:[%s3 + $0xc0] sm:$0xff]
    %v721 = vld [vmem:[%s3 + $0xc8] sm:$0xff]
    %v722 = vld [vmem:[%s3 + $0xd0] sm:$0xff]
    %v723 = vld [vmem:[%s3 + $0xd8] sm:$0xff]
    %v724 = vld [vmem:[%s3 + $0xe0] sm:$0xff]
    %v725 = vld [vmem:[%s3 + $0xe8] sm:$0xff]
    %v726 = vld [vmem:[%s3 + $0xf0] sm:$0xff]
    %v727 = vld [vmem:[%s3 + $0xf8] sm:$0xff]
    %v728 = vld [vmem:[%s3 + $0x100] sm:$0xff]
    %v729 = vld [vmem:[%s3 + $0x108] sm:$0xff]
    %v730 = vld [vmem:[%s3 + $0x110] sm:$0xff]
    %v731 = vld [vmem:[%s3 + $0x118] sm:$0xff]
    %v732 = vld [vmem:[%s3 + $0x120] sm:$0xff]
    %v733 = vld [vmem:[%s3 + $0x128] sm:$0xff]
    %v734 = vld [vmem:[%s3 + $0x130] sm:$0xff]
    %v735 = vld [vmem:[%s3 + $0x138] sm:$0xff]
    %v736 = vld [vmem:[%s3 + $0x140] sm:$0xff]
    %v737 = vld [vmem:[%s3 + $0x148] sm:$0xff]
    %v738 = vld [vmem:[%s3 + $0x150] sm:$0xff]
    %v739 = vld [vmem:[%s3 + $0x158] sm:$0xff]
    %v740 = vld [vmem:[%s3 + $0x160] sm:$0xff]
    %v741 = vld [vmem:[%s3 + $0x168] sm:$0xff]
    %v742 = vld [vmem:[%s3 + $0x170] sm:$0xff]
    %v743 = vld [vmem:[%s3 + $0x178] sm:$0xff]
    %v744 = vld [vmem:[%s3 + $0x180] sm:$0xff]
    %v745 = vld [vmem:[%s3 + $0x188] sm:$0xff]
    %v746 = vld [vmem:[%s3 + $0x190] sm:$0xff]
    %v747 = vld [vmem:[%s3 + $0x198] sm:$0xff]
    %v748 = vld [vmem:[%s3 + $0x1a0] sm:$0xff]
    %v749 = vld [vmem:[%s3 + $0x1a8] sm:$0xff]
    %v750 = vld [vmem:[%s3 + $0x1b0] sm:$0xff]
    %v751 = vld [vmem:[%s3 + $0x1b8] sm:$0xff]
    %v752 = vld [vmem:[%s3 + $0x1c0] sm:$0xff]
    %v753 = vld [vmem:[%s3 + $0x1c8] sm:$0xff]
    %v754 = vld [vmem:[%s3 + $0x1d0] sm:$0xff]
    %v755 = vld [vmem:[%s3 + $0x1d8] sm:$0xff]
    %v756 = vld [vmem:[%s3 + $0x1e0] sm:$0xff]
    %v757 = vld [vmem:[%s3 + $0x1e8] sm:$0xff]
    %v758 = vld [vmem:[%s3 + $0x1f0] sm:$0xff]
    %v759 = vld [vmem:[%s3 + $0x1f8] sm:$0xff]
    %v760 = vld [vmem:[%s3 + $0x200] sm:$0xff]
    %v761 = vld [vmem:[%s3 + $0x208] sm:$0xff]
    %v762 = vld [vmem:[%s3 + $0x210] sm:$0xff]
    %v763 = vld [vmem:[%s3 + $0x218] sm:$0xff]
    %v764 = vld [vmem:[%s3 + $0x220] sm:$0xff]
    %v765 = vld [vmem:[%s3 + $0x228] sm:$0xff]
    %v766 = vld [vmem:[%s3 + $0x230] sm:$0xff]
    %v767 = vld [vmem:[%s3 + $0x238] sm:$0xff]
    %v768 = vld [vmem:[%s3 + $0x240] sm:$0xff]
    %v769 = vld [vmem:[%s3 + $0x248] sm:$0xff]
    %v770 = vld [vmem:[%s3 + $0x250] sm:$0xff]
    %v771 = vld [vmem:[%s3 + $0x258] sm:$0xff]
    %v772 = vld [vmem:[%s3 + $0x260] sm:$0xff]
    %v773 = vld [vmem:[%s3 + $0x268] sm:$0xff]
    %v774 = vld [vmem:[%s3 + $0x270] sm:$0xff]
    %v775 = vld [vmem:[%s3 + $0x278] sm:$0xff]
    %v776 = vld [vmem:[%s3 + $0x280] sm:$0xff]
    %v777 = vld [vmem:[%s3 + $0x288] sm:$0xff]
    %v778 = vld [vmem:[%s3 + $0x290] sm:$0xff]
    %v779 = vld [vmem:[%s3 + $0x298] sm:$0xff]
    %v780 = vld [vmem:[%s3 + $0x2a0] sm:$0xff]
    %v781 = vld [vmem:[%s3 + $0x2a8] sm:$0xff]
    %v782 = vld [vmem:[%s3 + $0x2b0] sm:$0xff]
    %v783 = vld [vmem:[%s3 + $0x2b8] sm:$0xff]
    %v784 = vld [vmem:[%s3 + $0x2c0] sm:$0xff]
    %v785 = vld [vmem:[%s3 + $0x2c8] sm:$0xff]
    %v786 = vld [vmem:[%s3 + $0x2d0] sm:$0xff]
    %v787 = vld [vmem:[%s3 + $0x2d8] sm:$0xff]
    %v788 = vld [vmem:[%s3 + $0x2e0] sm:$0xff]
    %v789 = vld [vmem:[%s3 + $0x2e8] sm:$0xff]
    %v790 = vld [vmem:[%s3 + $0x2f0] sm:$0xff]
    %v791 = vld [vmem:[%s3 + $0x2f8] sm:$0xff]
    %v792 = vld [vmem:[%s3 + $0x300] sm:$0xff]
    %v793 = vld [vmem:[%s3 + $0x308] sm:$0xff]
    %v794 = vld [vmem:[%s3 + $0x310] sm:$0xff]
    %v795 = vld [vmem:[%s3 + $0x318] sm:$0xff]
    %v796 = vld [vmem:[%s3 + $0x320] sm:$0xff]
    %v797 = vld [vmem:[%s3 + $0x328] sm:$0xff]
    %v798 = vld [vmem:[%s3 + $0x330] sm:$0xff]
    %v799 = vld [vmem:[%s3 + $0x338] sm:$0xff]
    %v800 = vld [vmem:[%s3 + $0x340] sm:$0xff]
    %v801 = vld [vmem:[%s3 + $0x348] sm:$0xff]
    %v802 = vld [vmem:[%s3 + $0x350] sm:$0xff]
    %v803 = vld [vmem:[%s3 + $0x358] sm:$0xff]
    %v804 = vld [vmem:[%s3 + $0x360] sm:$0xff]
    %v805 = vld [vmem:[%s3 + $0x368] sm:$0xff]
    %v806 = vld [vmem:[%s3 + $0x370] sm:$0xff]
    %v807 = vld [vmem:[%s3 + $0x378] sm:$0xff]
    %v808 = vld [vmem:[%s3 + $0x380] sm:$0xff]
    %v809 = vld [vmem:[%s3 + $0x388] sm:$0xff]
    %v810 = vld [vmem:[%s3 + $0x390] sm:$0xff]
    %v811 = vld [vmem:[%s3 + $0x398] sm:$0xff]
    %v812 = vld [vmem:[%s3 + $0x3a0] sm:$0xff]
    %v813 = vld [vmem:[%s3 + $0x3a8] sm:$0xff]
    %v814 = vld [vmem:[%s3 + $0x3b0] sm:$0xff]
    %v815 = vld [vmem:[%s3 + $0x3b8] sm:$0xff]
    %v816 = vld [vmem:[%s3 + $0x3c0] sm:$0xff]
    %v817 = vld [vmem:[%s3 + $0x3c8] sm:$0xff]
    %v818 = vld [vmem:[%s3 + $0x3d0] sm:$0xff]
    %v819 = vld [vmem:[%s3 + $0x3d8] sm:$0xff]
    %v820 = vld [vmem:[%s3 + $0x3e0] sm:$0xff]
    %v821 = vld [vmem:[%s3 + $0x3e8] sm:$0xff]
    %v822 = vld [vmem:[%s3 + $0x3f0] sm:$0xff]
    %v823 = vld [vmem:[%s3 + $0x3f8] sm:$0xff]
    %v825 = vsel %vm95, %v697, 0
    %v828 = vsel %vm95, %v699, 0
    %v831 = vsel %vm95, %v701, 0
    %v834 = vsel %vm95, %v703, 0
    %v837 = vsel %vm95, %v705, 0
    %v840 = vsel %vm95, %v707, 0
    %v843 = vsel %vm95, %v709, 0
    %v846 = vsel %vm95, %v711, 0
    %v849 = vsel %vm95, %v713, 0
    %v852 = vsel %vm95, %v715, 0
    %v855 = vsel %vm95, %v717, 0
    %v858 = vsel %vm95, %v719, 0
    %v861 = vsel %vm95, %v721, 0
    %v864 = vsel %vm95, %v723, 0
    %v867 = vsel %vm95, %v725, 0
    %v870 = vsel %vm95, %v727, 0
    %v873 = vsel %vm95, %v729, 0
    %v876 = vsel %vm95, %v731, 0
    %v879 = vsel %vm95, %v733, 0
    %v882 = vsel %vm95, %v735, 0
    %v885 = vsel %vm95, %v737, 0
    %v888 = vsel %vm95, %v739, 0
    %v891 = vsel %vm95, %v741, 0
    %v894 = vsel %vm95, %v743, 0
    %v897 = vsel %vm95, %v745, 0
    %v900 = vsel %vm95, %v747, 0
    %v903 = vsel %vm95, %v749, 0
    %v906 = vsel %vm95, %v751, 0
    %v909 = vsel %vm95, %v753, 0
    %v912 = vsel %vm95, %v755, 0
    %v915 = vsel %vm95, %v757, 0
    %v918 = vsel %vm95, %v759, 0
    %v921 = vsel %vm95, %v761, 0
    %v924 = vsel %vm95, %v763, 0
    %v927 = vsel %vm95, %v765, 0
    %v930 = vsel %vm95, %v767, 0
    %v933 = vsel %vm95, %v769, 0
    %v936 = vsel %vm95, %v771, 0
    %v939 = vsel %vm95, %v773, 0
    %v942 = vsel %vm95, %v775, 0
    %v945 = vsel %vm95, %v777, 0
    %v948 = vsel %vm95, %v779, 0
    %v951 = vsel %vm95, %v781, 0
    %v954 = vsel %vm95, %v783, 0
    %v957 = vsel %vm95, %v785, 0
    %v960 = vsel %vm95, %v787, 0
    %v963 = vsel %vm95, %v789, 0
    %v966 = vsel %vm95, %v791, 0
    %v969 = vsel %vm95, %v793, 0
    %v972 = vsel %vm95, %v795, 0
    %v975 = vsel %vm95, %v797, 0
    %v978 = vsel %vm95, %v799, 0
    %v981 = vsel %vm95, %v801, 0
    %v984 = vsel %vm95, %v803, 0
    %v987 = vsel %vm95, %v805, 0
    %v990 = vsel %vm95, %v807, 0
    %v993 = vsel %vm95, %v809, 0
    %v996 = vsel %vm95, %v811, 0
    %v999 = vsel %vm95, %v813, 0
    %v1002 = vsel %vm95, %v815, 0
    %v1005 = vsel %vm95, %v817, 0
    %v1008 = vsel %vm95, %v819, 0
    %v1011 = vsel %vm95, %v821, 0
    %v1014 = vsel %vm95, %v823, 0
    %1016 = vmatprep.subr.mxu0 0.0
    %1017 = vmatpush1.msra.mxu0 %v672
    %1018 = vmatprep.subr.mxu0 0.0
    %1019 = vmatpush1.msra.mxu0 %v673
    %1020 = vmatprep.subr.mxu0 0.0
    %1021 = vmatpush1.msra.mxu0 %v674
    %1022 = vmatprep.subr.mxu0 0.0
    %1023 = vmatpush1.msra.mxu0 %v675
    %1024 = vmatprep.subr.mxu0 0.0
    %1025 = vmatpush1.msra.mxu0 %v676
    %1026 = vmatprep.subr.mxu0 0.0
    %1027 = vmatpush1.msra.mxu0 %v677
    %1028 = vmatprep.subr.mxu0 0.0
    %1029 = vmatpush1.msra.mxu0 %v678
    %1030 = vmatprep.subr.mxu0 0.0
    %1031 = vmatpush1.msra.mxu0 %v679
    %1032 = vmatprep.subr.mxu0 0.0
    %1033 = vmatpush1.msra.mxu0 %v680
    %1034 = vmatprep.subr.mxu0 0.0
    %1035 = vmatpush1.msra.mxu0 %v681
    %1036 = vmatprep.subr.mxu0 0.0
    %1037 = vmatpush1.msra.mxu0 %v682
    %1038 = vmatprep.subr.mxu0 0.0
    %1039 = vmatpush1.msra.mxu0 %v683
    %1040 = vmatprep.subr.mxu0 0.0
    %1041 = vmatpush1.msra.mxu0 %v684
    %1042 = vmatprep.subr.mxu0 0.0
    %1043 = vmatpush1.msra.mxu0 %v685
    %1044 = vmatprep.subr.mxu0 0.0
    %1045 = vmatpush1.msra.mxu0 %v686
    %1046 = vmatprep.subr.mxu0 0.0
    %1047 = vmatpush1.msra.mxu0 %v687
    %1048 = vmatprep.subr.mxu0 0.0
    %1049 = vmatpush1.msra.mxu0 %v688
    %1050 = vmatprep.subr.mxu0 0.0
    %1051 = vmatpush1.msra.mxu0 %v689
    %1052 = vmatprep.subr.mxu0 0.0
    %1053 = vmatpush1.msra.mxu0 %v690
    %1054 = vmatprep.subr.mxu0 0.0
    %1055 = vmatpush1.msra.mxu0 %v691
    %1056 = vmatprep.subr.mxu0 0.0
    %1057 = vmatpush1.msra.mxu0 %v692
    %1058 = vmatprep.subr.mxu0 0.0
    %1059 = vmatpush1.msra.mxu0 %v693
    %1060 = vmatprep.subr.mxu0 0.0
    %1061 = vmatpush1.msra.mxu0 %v694
    %1062 = vmatprep.subr.mxu0 0.0
    %1063 = vmatpush1.msra.mxu0 %v695
    %1064 = vmatprep.subr.mxu0 0.0
    %1065 = vmatpush1.msra.mxu0 0.0
    %1066 = vmatprep.subr.mxu0 0.0
    %1067 = vmatpush1.msra.mxu0 0.0
    %1068 = vmatprep.subr.mxu0 0.0
    %1069 = vmatpush1.msra.mxu0 0.0
    %1070 = vmatprep.subr.mxu0 0.0
    %1071 = vmatpush1.msra.mxu0 0.0
    %1072 = vmatprep.subr.mxu0 0.0
    %1073 = vmatpush1.msra.mxu0 0.0
    %1074 = vmatprep.subr.mxu0 0.0
    %1075 = vmatpush1.msra.mxu0 0.0
    %1076 = vmatprep.subr.mxu0 0.0
    %1077 = vmatpush1.msra.mxu0 0.0
    %1078 = vmatprep.subr.mxu0 0.0
    %1079 = vmatpush1.msra.mxu0 0.0
    %1080 = vmatprep.mubr.f32.mxu0 %v825
    %1081 = vmatmul.mubr.f32.gmra.mrb[0].mxu0 %v696
    %v1082 = vpop.f32.mrb[0].mxu0
    %v1083 = vadd.f32 0.0, %v1082
    %v1084 = vpop.f32.mrb[0].mxu0
    %1085 = vmatprep.mubr.f32.mxu0 %v828
    %1086 = vmatmul.mubr.f32.gmra.mrb[0].mxu0 %v698
    %v1087 = vpop.f32.mrb[0].mxu0
    %v1088 = vadd.f32 0.0, %v1087
    %v1089 = vpop.f32.mrb[0].mxu0
    %1090 = vmatprep.mubr.f32.mxu0 %v831
    %1091 = vmatmul.mubr.f32.gmra.mrb[0].mxu0 %v700
    %v1092 = vpop.f32.mrb[0].mxu0
    %v1093 = vadd.f32 0.0, %v1092
    %v1094 = vpop.f32.mrb[0].mxu0
    %1095 = vmatprep.mubr.f32.mxu0 %v834
    %1096 = vmatmul.mubr.f32.gmra.mrb[0].mxu0 %v702
    %v1097 = vpop.f32.mrb[0].mxu0
    %v1098 = vadd.f32 0.0, %v1097
    %v1099 = vpop.f32.mrb[0].mxu0
    %1100 = vmatprep.mubr.f32.mxu0 %v837
    %1101 = vmatmul.mubr.f32.gmra.mrb[0].mxu0 %v704
    %v1102 = vpop.f32.mrb[0].mxu0
    %v1103 = vadd.f32 0.0, %v1102
    %v1104 = vpop.f32.mrb[0].mxu0
    %1105 = vmatprep.mubr.f32.mxu0 %v840
    %1106 = vmatmul.mubr.f32.gmra.mrb[0].mxu0 %v706
    %v1107 = vpop.f32.mrb[0].mxu0
    %v1108 = vadd.f32 0.0, %v1107
    %v1109 = vpop.f32.mrb[0].mxu0
    %1110 = vmatprep.mubr.f32.mxu0 %v843
    %1111 = vmatmul.mubr.f32.gmra.mrb[0].mxu0 %v708
    %v1112 = vpop.f32.mrb[0].mxu0
    %v1113 = vadd.f32 0.0, %v1112
    %v1114 = vpop.f32.mrb[0].mxu0
    %1115 = vmatprep.mubr.f32.mxu0 %v846
    %1116 = vmatmul.mubr.f32.gmra.mrb[0].mxu0 %v710
    %v1117 = vpop.f32.mrb[0].mxu0
    %v1118 = vadd.f32 0.0, %v1117
    %v1119 = vpop.f32.mrb[0].mxu0
    %1120 = vmatprep.mubr.f32.mxu0 %v849
    %1121 = vmatmul.mubr.f32.gmra.mrb[0].mxu0 %v712
    %v1122 = vpop.f32.mrb[0].mxu0
    %v1123 = vadd.f32 0.0, %v1122
    %v1124 = vpop.f32.mrb[0].mxu0
    %1125 = vmatprep.mubr.f32.mxu0 %v852
    %1126 = vmatmul.mubr.f32.gmra.mrb[0].mxu0 %v714
    %v1127 = vpop.f32.mrb[0].mxu0
    %v1128 = vadd.f32 0.0, %v1127
    %v1129 = vpop.f32.mrb[0].mxu0
    %1130 = vmatprep.mubr.f32.mxu0 %v855
    %1131 = vmatmul.mubr.f32.gmra.mrb[0].mxu0 %v716
    %v1132 = vpop.f32.mrb[0].mxu0
    %v1133 = vadd.f32 0.0, %v1132
    %v1134 = vpop.f32.mrb[0].mxu0
    %1135 = vmatprep.mubr.f32.mxu0 %v858
    %1136 = vmatmul.mubr.f32.gmra.mrb[0].mxu0 %v718
    %v1137 = vpop.f32.mrb[0].mxu0
    %v1138 = vadd.f32 0.0, %v1137
    %v1139 = vpop.f32.mrb[0].mxu0
    %1140 = vmatprep.mubr.f32.mxu0 %v861
    %1141 = vmatmul.mubr.f32.gmra.mrb[0].mxu0 %v720
    %v1142 = vpop.f32.mrb[0].mxu0
    %v1143 = vadd.f32 0.0, %v1142
    %v1144 = vpop.f32.mrb[0].mxu0
    %1145 = vmatprep.mubr.f32.mxu0 %v864
    %1146 = vmatmul.mubr.f32.gmra.mrb[0].mxu0 %v722
    %v1147 = vpop.f32.mrb[0].mxu0
    %v1148 = vadd.f32 0.0, %v1147
    %v1149 = vpop.f32.mrb[0].mxu0
    %1150 = vmatprep.mubr.f32.mxu0 %v867
    %1151 = vmatmul.mubr.f32.gmra.mrb[0].mxu0 %v724
    %v1152 = vpop.f32.mrb[0].mxu0
    %v1153 = vadd.f32 0.0, %v1152
    %v1154 = vpop.f32.mrb[0].mxu0
    %1155 = vmatprep.mubr.f32.mxu0 %v870
    %1156 = vmatmul.mubr.f32.gmra.mrb[0].mxu0 %v726
    %v1157 = vpop.f32.mrb[0].mxu0
    %v1158 = vadd.f32 0.0, %v1157
    %v1159 = vpop.f32.mrb[0].mxu0
    %1160 = vmatprep.mubr.f32.mxu0 %v873
    %1161 = vmatmul.mubr.f32.gmra.mrb[0].mxu0 %v728
    %v1162 = vpop.f32.mrb[0].mxu0
    %v1163 = vadd.f32 0.0, %v1162
    %v1164 = vpop.f32.mrb[0].mxu0
    %1165 = vmatprep.mubr.f32.mxu0 %v876
    %1166 = vmatmul.mubr.f32.gmra.mrb[0].mxu0 %v730
    %v1167 = vpop.f32.mrb[0].mxu0
    %v1168 = vadd.f32 0.0, %v1167
    %v1169 = vpop.f32.mrb[0].mxu0
    %1170 = vmatprep.mubr.f32.mxu0 %v879
    %1171 = vmatmul.mubr.f32.gmra.mrb[0].mxu0 %v732
    %v1172 = vpop.f32.mrb[0].mxu0
    %v1173 = vadd.f32 0.0, %v1172
    %v1174 = vpop.f32.mrb[0].mxu0
    %1175 = vmatprep.mubr.f32.mxu0 %v882
    %1176 = vmatmul.mubr.f32.gmra.mrb[0].mxu0 %v734
    %v1177 = vpop.f32.mrb[0].mxu0
    %v1178 = vadd.f32 0.0, %v1177
    %v1179 = vpop.f32.mrb[0].mxu0
    %1180 = vmatprep.mubr.f32.mxu0 %v885
    %1181 = vmatmul.mubr.f32.gmra.mrb[0].mxu0 %v736
    %v1182 = vpop.f32.mrb[0].mxu0
    %v1183 = vadd.f32 0.0, %v1182
    %v1184 = vpop.f32.mrb[0].mxu0
    %1185 = vmatprep.mubr.f32.mxu0 %v888
    %1186 = vmatmul.mubr.f32.gmra.mrb[0].mxu0 %v738
    %v1187 = vpop.f32.mrb[0].mxu0
    %v1188 = vadd.f32 0.0, %v1187
    %v1189 = vpop.f32.mrb[0].mxu0
    %1190 = vmatprep.mubr.f32.mxu0 %v891
    %1191 = vmatmul.mubr.f32.gmra.mrb[0].mxu0 %v740
    %v1192 = vpop.f32.mrb[0].mxu0
    %v1193 = vadd.f32 0.0, %v1192
    %v1194 = vpop.f32.mrb[0].mxu0
    %1195 = vmatprep.mubr.f32.mxu0 %v894
    %1196 = vmatmul.mubr.f32.gmra.mrb[0].mxu0 %v742
    %v1197 = vpop.f32.mrb[0].mxu0
    %v1198 = vadd.f32 0.0, %v1197
    %v1199 = vpop.f32.mrb[0].mxu0
    %1200 = vmatprep.mubr.f32.mxu0 %v897
    %1201 = vmatmul.mubr.f32.gmra.mrb[0].mxu0 %v744
    %v1202 = vpop.f32.mrb[0].mxu0
    %v1203 = vadd.f32 0.0, %v1202
    %v1204 = vpop.f32.mrb[0].mxu0
    %1205 = vmatprep.mubr.f32.mxu0 %v900
    %1206 = vmatmul.mubr.f32.gmra.mrb[0].mxu0 %v746
    %v1207 = vpop.f32.mrb[0].mxu0
    %v1208 = vadd.f32 0.0, %v1207
    %v1209 = vpop.f32.mrb[0].mxu0
    %1210 = vmatprep.mubr.f32.mxu0 %v903
    %1211 = vmatmul.mubr.f32.gmra.mrb[0].mxu0 %v748
    %v1212 = vpop.f32.mrb[0].mxu0
    %v1213 = vadd.f32 0.0, %v1212
    %v1214 = vpop.f32.mrb[0].mxu0
    %1215 = vmatprep.mubr.f32.mxu0 %v906
    %1216 = vmatmul.mubr.f32.gmra.mrb[0].mxu0 %v750
    %v1217 = vpop.f32.mrb[0].mxu0
    %v1218 = vadd.f32 0.0, %v1217
    %v1219 = vpop.f32.mrb[0].mxu0
    %1220 = vmatprep.mubr.f32.mxu0 %v909
    %1221 = vmatmul.mubr.f32.gmra.mrb[0].mxu0 %v752
    %v1222 = vpop.f32.mrb[0].mxu0
    %v1223 = vadd.f32 0.0, %v1222
    %v1224 = vpop.f32.mrb[0].mxu0
    %1225 = vmatprep.mubr.f32.mxu0 %v912
    %1226 = vmatmul.mubr.f32.gmra.mrb[0].mxu0 %v754
    %v1227 = vpop.f32.mrb[0].mxu0
    %v1228 = vadd.f32 0.0, %v1227
    %v1229 = vpop.f32.mrb[0].mxu0
    %1230 = vmatprep.mubr.f32.mxu0 %v915
    %1231 = vmatmul.mubr.f32.gmra.mrb[0].mxu0 %v756
    %v1232 = vpop.f32.mrb[0].mxu0
    %v1233 = vadd.f32 0.0, %v1232
    %v1234 = vpop.f32.mrb[0].mxu0
    %1235 = vmatprep.mubr.f32.mxu0 %v918
    %1236 = vmatmul.mubr.f32.gmra.mrb[0].mxu0 %v758
    %v1237 = vpop.f32.mrb[0].mxu0
    %v1238 = vadd.f32 0.0, %v1237
    %v1239 = vpop.f32.mrb[0].mxu0
    %1240 = vmatprep.mubr.f32.mxu0 %v921
    %1241 = vmatmul.mubr.f32.gmra.mrb[0].mxu0 %v760
    %v1242 = vpop.f32.mrb[0].mxu0
    %v1243 = vadd.f32 0.0, %v1242
    %v1244 = vpop.f32.mrb[0].mxu0
    %1245 = vmatprep.mubr.f32.mxu0 %v924
    %1246 = vmatmul.mubr.f32.gmra.mrb[0].mxu0 %v762
    %v1247 = vpop.f32.mrb[0].mxu0
    %v1248 = vadd.f32 0.0, %v1247
    %v1249 = vpop.f32.mrb[0].mxu0
    %1250 = vmatprep.mubr.f32.mxu0 %v927
    %1251 = vmatmul.mubr.f32.gmra.mrb[0].mxu0 %v764
    %v1252 = vpop.f32.mrb[0].mxu0
    %v1253 = vadd.f32 0.0, %v1252
    %v1254 = vpop.f32.mrb[0].mxu0
    %1255 = vmatprep.mubr.f32.mxu0 %v930
    %1256 = vmatmul.mubr.f32.gmra.mrb[0].mxu0 %v766
    %v1257 = vpop.f32.mrb[0].mxu0
    %v1258 = vadd.f32 0.0, %v1257
    %v1259 = vpop.f32.mrb[0].mxu0
    %1260 = vmatprep.mubr.f32.mxu0 %v933
    %1261 = vmatmul.mubr.f32.gmra.mrb[0].mxu0 %v768
    %v1262 = vpop.f32.mrb[0].mxu0
    %v1263 = vadd.f32 0.0, %v1262
    %v1264 = vpop.f32.mrb[0].mxu0
    %1265 = vmatprep.mubr.f32.mxu0 %v936
    %1266 = vmatmul.mubr.f32.gmra.mrb[0].mxu0 %v770
    %v1267 = vpop.f32.mrb[0].mxu0
    %v1268 = vadd.f32 0.0, %v1267
    %v1269 = vpop.f32.mrb[0].mxu0
    %1270 = vmatprep.mubr.f32.mxu0 %v939
    %1271 = vmatmul.mubr.f32.gmra.mrb[0].mxu0 %v772
    %v1272 = vpop.f32.mrb[0].mxu0
    %v1273 = vadd.f32 0.0, %v1272
    %v1274 = vpop.f32.mrb[0].mxu0
    %1275 = vmatprep.mubr.f32.mxu0 %v942
    %1276 = vmatmul.mubr.f32.gmra.mrb[0].mxu0 %v774
    %v1277 = vpop.f32.mrb[0].mxu0
    %v1278 = vadd.f32 0.0, %v1277
    %v1279 = vpop.f32.mrb[0].mxu0
    %1280 = vmatprep.mubr.f32.mxu0 %v945
    %1281 = vmatmul.mubr.f32.gmra.mrb[0].mxu0 %v776
    %v1282 = vpop.f32.mrb[0].mxu0
    %v1283 = vadd.f32 0.0, %v1282
    %v1284 = vpop.f32.mrb[0].mxu0
    %1285 = vmatprep.mubr.f32.mxu0 %v948
    %1286 = vmatmul.mubr.f32.gmra.mrb[0].mxu0 %v778
    %v1287 = vpop.f32.mrb[0].mxu0
    %v1288 = vadd.f32 0.0, %v1287
    %v1289 = vpop.f32.mrb[0].mxu0
    %1290 = vmatprep.mubr.f32.mxu0 %v951
    %1291 = vmatmul.mubr.f32.gmra.mrb[0].mxu0 %v780
    %v1292 = vpop.f32.mrb[0].mxu0
    %v1293 = vadd.f32 0.0, %v1292
    %v1294 = vpop.f32.mrb[0].mxu0
    %1295 = vmatprep.mubr.f32.mxu0 %v954
    %1296 = vmatmul.mubr.f32.gmra.mrb[0].mxu0 %v782
    %v1297 = vpop.f32.mrb[0].mxu0
    %v1298 = vadd.f32 0.0, %v1297
    %v1299 = vpop.f32.mrb[0].mxu0
    %1300 = vmatprep.mubr.f32.mxu0 %v957
    %1301 = vmatmul.mubr.f32.gmra.mrb[0].mxu0 %v784
    %v1302 = vpop.f32.mrb[0].mxu0
    %v1303 = vadd.f32 0.0, %v1302
    %v1304 = vpop.f32.mrb[0].mxu0
    %1305 = vmatprep.mubr.f32.mxu0 %v960
    %1306 = vmatmul.mubr.f32.gmra.mrb[0].mxu0 %v786
    %v1307 = vpop.f32.mrb[0].mxu0
    %v1308 = vadd.f32 0.0, %v1307
    %v1309 = vpop.f32.mrb[0].mxu0
    %1310 = vmatprep.mubr.f32.mxu0 %v963
    %1311 = vmatmul.mubr.f32.gmra.mrb[0].mxu0 %v788
    %v1312 = vpop.f32.mrb[0].mxu0
    %v1313 = vadd.f32 0.0, %v1312
    %v1314 = vpop.f32.mrb[0].mxu0
    %1315 = vmatprep.mubr.f32.mxu0 %v966
    %1316 = vmatmul.mubr.f32.gmra.mrb[0].mxu0 %v790
    %v1317 = vpop.f32.mrb[0].mxu0
    %v1318 = vadd.f32 0.0, %v1317
    %v1319 = vpop.f32.mrb[0].mxu0
    %1320 = vmatprep.mubr.f32.mxu0 %v969
    %1321 = vmatmul.mubr.f32.gmra.mrb[0].mxu0 %v792
    %v1322 = vpop.f32.mrb[0].mxu0
    %v1323 = vadd.f32 0.0, %v1322
    %v1324 = vpop.f32.mrb[0].mxu0
    %1325 = vmatprep.mubr.f32.mxu0 %v972
    %1326 = vmatmul.mubr.f32.gmra.mrb[0].mxu0 %v794
    %v1327 = vpop.f32.mrb[0].mxu0
    %v1328 = vadd.f32 0.0, %v1327
    %v1329 = vpop.f32.mrb[0].mxu0
    %1330 = vmatprep.mubr.f32.mxu0 %v975
    %1331 = vmatmul.mubr.f32.gmra.mrb[0].mxu0 %v796
    %v1332 = vpop.f32.mrb[0].mxu0
    %v1333 = vadd.f32 0.0, %v1332
    %v1334 = vpop.f32.mrb[0].mxu0
    %1335 = vmatprep.mubr.f32.mxu0 %v978
    %1336 = vmatmul.mubr.f32.gmra.mrb[0].mxu0 %v798
    %v1337 = vpop.f32.mrb[0].mxu0
    %v1338 = vadd.f32 0.0, %v1337
    %v1339 = vpop.f32.mrb[0].mxu0
    %1340 = vmatprep.mubr.f32.mxu0 %v981
    %1341 = vmatmul.mubr.f32.gmra.mrb[0].mxu0 %v800
    %v1342 = vpop.f32.mrb[0].mxu0
    %v1343 = vadd.f32 0.0, %v1342
    %v1344 = vpop.f32.mrb[0].mxu0
    %1345 = vmatprep.mubr.f32.mxu0 %v984
    %1346 = vmatmul.mubr.f32.gmra.mrb[0].mxu0 %v802
    %v1347 = vpop.f32.mrb[0].mxu0
    %v1348 = vadd.f32 0.0, %v1347
    %v1349 = vpop.f32.mrb[0].mxu0
    %1350 = vmatprep.mubr.f32.mxu0 %v987
    %1351 = vmatmul.mubr.f32.gmra.mrb[0].mxu0 %v804
    %v1352 = vpop.f32.mrb[0].mxu0
    %v1353 = vadd.f32 0.0, %v1352
    %v1354 = vpop.f32.mrb[0].mxu0
    %1355 = vmatprep.mubr.f32.mxu0 %v990
    %1356 = vmatmul.mubr.f32.gmra.mrb[0].mxu0 %v806
    %v1357 = vpop.f32.mrb[0].mxu0
    %v1358 = vadd.f32 0.0, %v1357
    %v1359 = vpop.f32.mrb[0].mxu0
    %1360 = vmatprep.mubr.f32.mxu0 %v993
    %1361 = vmatmul.mubr.f32.gmra.mrb[0].mxu0 %v808
    %v1362 = vpop.f32.mrb[0].mxu0
    %v1363 = vadd.f32 0.0, %v1362
    %v1364 = vpop.f32.mrb[0].mxu0
    %1365 = vmatprep.mubr.f32.mxu0 %v996
    %1366 = vmatmul.mubr.f32.gmra.mrb[0].mxu0 %v810
    %v1367 = vpop.f32.mrb[0].mxu0
    %v1368 = vadd.f32 0.0, %v1367
    %v1369 = vpop.f32.mrb[0].mxu0
    %1370 = vmatprep.mubr.f32.mxu0 %v999
    %1371 = vmatmul.mubr.f32.gmra.mrb[0].mxu0 %v812
    %v1372 = vpop.f32.mrb[0].mxu0
    %v1373 = vadd.f32 0.0, %v1372
    %v1374 = vpop.f32.mrb[0].mxu0
    %1375 = vmatprep.mubr.f32.mxu0 %v1002
    %1376 = vmatmul.mubr.f32.gmra.mrb[0].mxu0 %v814
    %v1377 = vpop.f32.mrb[0].mxu0
    %v1378 = vadd.f32 0.0, %v1377
    %v1379 = vpop.f32.mrb[0].mxu0
    %1380 = vmatprep.mubr.f32.mxu0 %v1005
    %1381 = vmatmul.mubr.f32.gmra.mrb[0].mxu0 %v816
    %v1382 = vpop.f32.mrb[0].mxu0
    %v1383 = vadd.f32 0.0, %v1382
    %v1384 = vpop.f32.mrb[0].mxu0
    %1385 = vmatprep.mubr.f32.mxu0 %v1008
    %1386 = vmatmul.mubr.f32.gmra.mrb[0].mxu0 %v818
    %v1387 = vpop.f32.mrb[0].mxu0
    %v1388 = vadd.f32 0.0, %v1387
    %v1389 = vpop.f32.mrb[0].mxu0
    %1390 = vmatprep.mubr.f32.mxu0 %v1011
    %1391 = vmatmul.mubr.f32.gmra.mrb[0].mxu0 %v820
    %v1392 = vpop.f32.mrb[0].mxu0
    %v1393 = vadd.f32 0.0, %v1392
    %v1394 = vpop.f32.mrb[0].mxu0
    %1395 = vmatprep.mubr.f32.mxu0 %v1014
    %1396 = vmatmul.mubr.f32.gmra.mrb[0].mxu0 %v822
    %v1397 = vpop.f32.mrb[0].mxu0
    %v1398 = vadd.f32 0.0, %v1397
    %v1399 = vpop.f32.mrb[0].mxu0
    %1400 = vdwg.mxu0
    %v1401 = vld [vmem:[%s4] sm:$0xff]
    %v1402 = vld [vmem:[%s4 + $0x8] sm:$0xff]
    %v1405 = vcombine.high %v1401, %v1401
    %v1407 = vunpack.c.l.s4 1966171168
    %v1408 = vunpack.c.0.s8 %v1407
    %v1409 = vlaneseq
    %v1410 = vshrl.u32 %v1409, 7
    %v1411 = vsub.s32 %v1408, %v1410
    %v1412 = vrot.slane %v1401, %v1411
    %v1414 = vunpack.c.l.s4 1966171168
    %v1415 = vunpack.c.0.s8 %v1414
    %v1416 = vlaneseq
    %v1417 = vshrl.u32 %v1416, 7
    %v1418 = vsub.s32 %v1415, %v1417
    %v1419 = vrot.slane %v1405, %v1418
    %v1420 = vcombine.high %v1412, %v1412
    %v1421 = vcombine.high %v1419, %v1419
    %v1423 = vunpack.c.l.s4 1966171168
    %v1424 = vunpack.c.0.s8 %v1423
    %v1425 = vlaneseq
    %v1426 = vshrl.u32 %v1425, 7
    %v1427 = vsub.s32 %v1424, %v1426
    %v1428 = vrot.slane %v1412, %v1427
    %v1430 = vunpack.c.l.s4 1966171168
    %v1431 = vunpack.c.0.s8 %v1430
    %v1432 = vlaneseq
    %v1433 = vshrl.u32 %v1432, 7
    %v1434 = vsub.s32 %v1431, %v1433
    %v1435 = vrot.slane %v1419, %v1434
    %v1437 = vunpack.c.l.s4 1966171168
    %v1438 = vunpack.c.0.s8 %v1437
    %v1439 = vlaneseq
    %v1440 = vshrl.u32 %v1439, 7
    %v1441 = vsub.s32 %v1438, %v1440
    %v1442 = vrot.slane %v1420, %v1441
    %v1444 = vunpack.c.l.s4 1966171168
    %v1445 = vunpack.c.0.s8 %v1444
    %v1446 = vlaneseq
    %v1447 = vshrl.u32 %v1446, 7
    %v1448 = vsub.s32 %v1445, %v1447
    %v1449 = vrot.slane %v1421, %v1448
    %v1450 = vcombine.high %v1428, %v1428
    %v1451 = vcombine.high %v1435, %v1435
    %v1452 = vcombine.high %v1442, %v1442
    %v1453 = vcombine.high %v1449, %v1449
    %v1454 = vcombine.high %v1402, %v1402
    %v1456 = vunpack.c.l.s4 1966171168
    %v1457 = vunpack.c.0.s8 %v1456
    %v1458 = vlaneseq
    %v1459 = vshrl.u32 %v1458, 7
    %v1460 = vsub.s32 %v1457, %v1459
    %v1461 = vrot.slane %v1402, %v1460
    %v1463 = vunpack.c.l.s4 1966171168
    %v1464 = vunpack.c.0.s8 %v1463
    %v1465 = vlaneseq
    %v1466 = vshrl.u32 %v1465, 7
    %v1467 = vsub.s32 %v1464, %v1466
    %v1468 = vrot.slane %v1454, %v1467
    %v1469 = vcombine.high %v1461, %v1461
    %v1470 = vcombine.high %v1468, %v1468
    %v1472 = vunpack.c.l.s4 1966171168
    %v1473 = vunpack.c.0.s8 %v1472
    %v1474 = vlaneseq
    %v1475 = vshrl.u32 %v1474, 7
    %v1476 = vsub.s32 %v1473, %v1475
    %v1477 = vrot.slane %v1461, %v1476
    %v1479 = vunpack.c.l.s4 1966171168
    %v1480 = vunpack.c.0.s8 %v1479
    %v1481 = vlaneseq
    %v1482 = vshrl.u32 %v1481, 7
    %v1483 = vsub.s32 %v1480, %v1482
    %v1484 = vrot.slane %v1468, %v1483
    %v1486 = vunpack.c.l.s4 1966171168
    %v1487 = vunpack.c.0.s8 %v1486
    %v1488 = vlaneseq
    %v1489 = vshrl.u32 %v1488, 7
    %v1490 = vsub.s32 %v1487, %v1489
    %v1491 = vrot.slane %v1469, %v1490
    %v1493 = vunpack.c.l.s4 1966171168
    %v1494 = vunpack.c.0.s8 %v1493
    %v1495 = vlaneseq
    %v1496 = vshrl.u32 %v1495, 7
    %v1497 = vsub.s32 %v1494, %v1496
    %v1498 = vrot.slane %v1470, %v1497
    %v1499 = vcombine.high %v1477, %v1477
    %v1500 = vcombine.high %v1484, %v1484
    %v1501 = vcombine.high %v1491, %v1491
    %v1502 = vcombine.high %v1498, %v1498
    %v1503 = vlaneseq
    %v1504 = vshrl.u32 %v1503, 7
    %v1505 = vsub.s32 0, %v1504
    %v1506 = vrot.slane %v1428, %v1505
    %v1507 = vlaneseq
    %v1508 = vshrl.u32 %v1507, 7
    %v1509 = vsub.s32 0, %v1508
    %v1510 = vrot.slane %v1442, %v1509
    %v1511 = vlaneseq
    %v1512 = vshrl.u32 %v1511, 7
    %v1513 = vsub.s32 0, %v1512
    %v1514 = vrot.slane %v1450, %v1513
    %v1515 = vlaneseq
    %v1516 = vshrl.u32 %v1515, 7
    %v1517 = vsub.s32 0, %v1516
    %v1518 = vrot.slane %v1452, %v1517
    %v1519 = vlaneseq
    %v1520 = vshrl.u32 %v1519, 7
    %v1521 = vsub.s32 0, %v1520
    %v1522 = vrot.slane %v1435, %v1521
    %v1523 = vlaneseq
    %v1524 = vshrl.u32 %v1523, 7
    %v1525 = vsub.s32 0, %v1524
    %v1526 = vrot.slane %v1449, %v1525
    %v1527 = vlaneseq
    %v1528 = vshrl.u32 %v1527, 7
    %v1529 = vsub.s32 0, %v1528
    %v1530 = vrot.slane %v1451, %v1529
    %v1531 = vlaneseq
    %v1532 = vshrl.u32 %v1531, 7
    %v1533 = vsub.s32 0, %v1532
    %v1534 = vrot.slane %v1453, %v1533
    %v1535 = vlaneseq
    %v1536 = vshrl.u32 %v1535, 7
    %v1537 = vsub.s32 0, %v1536
    %v1538 = vrot.slane %v1477, %v1537
    %v1539 = vlaneseq
    %v1540 = vshrl.u32 %v1539, 7
    %v1541 = vsub.s32 0, %v1540
    %v1542 = vrot.slane %v1491, %v1541
    %v1543 = vlaneseq
    %v1544 = vshrl.u32 %v1543, 7
    %v1545 = vsub.s32 0, %v1544
    %v1546 = vrot.slane %v1499, %v1545
    %v1547 = vlaneseq
    %v1548 = vshrl.u32 %v1547, 7
    %v1549 = vsub.s32 0, %v1548
    %v1550 = vrot.slane %v1501, %v1549
    %v1551 = vlaneseq
    %v1552 = vshrl.u32 %v1551, 7
    %v1553 = vsub.s32 0, %v1552
    %v1554 = vrot.slane %v1484, %v1553
    %v1555 = vlaneseq
    %v1556 = vshrl.u32 %v1555, 7
    %v1557 = vsub.s32 0, %v1556
    %v1558 = vrot.slane %v1498, %v1557
    %v1559 = vlaneseq
    %v1560 = vshrl.u32 %v1559, 7
    %v1561 = vsub.s32 0, %v1560
    %v1562 = vrot.slane %v1500, %v1561
    %v1563 = vlaneseq
    %v1564 = vshrl.u32 %v1563, 7
    %v1565 = vsub.s32 0, %v1564
    %v1566 = vrot.slane %v1502, %v1565
    %v1583 = vadd.f32 %v1083, %v1506
    %v1584 = vadd.f32 %v1088, %v1506
    %v1585 = vadd.f32 %v1093, %v1506
    %v1586 = vadd.f32 %v1098, %v1506
    %v1587 = vadd.f32 %v1103, %v1510
    %v1588 = vadd.f32 %v1108, %v1510
    %v1589 = vadd.f32 %v1113, %v1510
    %v1590 = vadd.f32 %v1118, %v1510
    %v1591 = vadd.f32 %v1123, %v1514
    %v1592 = vadd.f32 %v1128, %v1514
    %v1593 = vadd.f32 %v1133, %v1514
    %v1594 = vadd.f32 %v1138, %v1514
    %v1595 = vadd.f32 %v1143, %v1518
    %v1596 = vadd.f32 %v1148, %v1518
    %v1597 = vadd.f32 %v1153, %v1518
    %v1598 = vadd.f32 %v1158, %v1518
    %v1599 = vadd.f32 %v1163, %v1522
    %v1600 = vadd.f32 %v1168, %v1522
    %v1601 = vadd.f32 %v1173, %v1522
    %v1602 = vadd.f32 %v1178, %v1522
    %v1603 = vadd.f32 %v1183, %v1526
    %v1604 = vadd.f32 %v1188, %v1526
    %v1605 = vadd.f32 %v1193, %v1526
    %v1606 = vadd.f32 %v1198, %v1526
    %v1607 = vadd.f32 %v1203, %v1530
    %v1608 = vadd.f32 %v1208, %v1530
    %v1609 = vadd.f32 %v1213, %v1530
    %v1610 = vadd.f32 %v1218, %v1530
    %v1611 = vadd.f32 %v1223, %v1534
    %v1612 = vadd.f32 %v1228, %v1534
    %v1613 = vadd.f32 %v1233, %v1534
    %v1614 = vadd.f32 %v1238, %v1534
    %v1615 = vadd.f32 %v1243, %v1538
    %v1616 = vadd.f32 %v1248, %v1538
    %v1617 = vadd.f32 %v1253, %v1538
    %v1618 = vadd.f32 %v1258, %v1538
    %v1619 = vadd.f32 %v1263, %v1542
    %v1620 = vadd.f32 %v1268, %v1542
    %v1621 = vadd.f32 %v1273, %v1542
    %v1622 = vadd.f32 %v1278, %v1542
    %v1623 = vadd.f32 %v1283, %v1546
    %v1624 = vadd.f32 %v1288, %v1546
    %v1625 = vadd.f32 %v1293, %v1546
    %v1626 = vadd.f32 %v1298, %v1546
    %v1627 = vadd.f32 %v1303, %v1550
    %v1628 = vadd.f32 %v1308, %v1550
    %v1629 = vadd.f32 %v1313, %v1550
    %v1630 = vadd.f32 %v1318, %v1550
    %v1631 = vadd.f32 %v1323, %v1554
    %v1632 = vadd.f32 %v1328, %v1554
    %v1633 = vadd.f32 %v1333, %v1554
    %v1634 = vadd.f32 %v1338, %v1554
    %v1635 = vadd.f32 %v1343, %v1558
    %v1636 = vadd.f32 %v1348, %v1558
    %v1637 = vadd.f32 %v1353, %v1558
    %v1638 = vadd.f32 %v1358, %v1558
    %v1639 = vadd.f32 %v1363, %v1562
    %v1640 = vadd.f32 %v1368, %v1562
    %v1641 = vadd.f32 %v1373, %v1562
    %v1642 = vadd.f32 %v1378, %v1562
    %v1643 = vadd.f32 %v1383, %v1566
    %v1644 = vadd.f32 %v1388, %v1566
    %v1645 = vadd.f32 %v1393, %v1566
    %v1646 = vadd.f32 %v1398, %v1566
    %v1647 = vmax.f32 %v1583, 0.0
    %v1648 = vmax.f32 %v1584, 0.0
    %v1649 = vmax.f32 %v1585, 0.0
    %v1650 = vmax.f32 %v1586, 0.0
    %v1651 = vmax.f32 %v1587, 0.0
    %v1652 = vmax.f32 %v1588, 0.0
    %v1653 = vmax.f32 %v1589, 0.0
    %v1654 = vmax.f32 %v1590, 0.0
    %v1655 = vmax.f32 %v1591, 0.0
    %v1656 = vmax.f32 %v1592, 0.0
    %v1657 = vmax.f32 %v1593, 0.0
    %v1658 = vmax.f32 %v1594, 0.0
    %v1659 = vmax.f32 %v1595, 0.0
    %v1660 = vmax.f32 %v1596, 0.0
    %v1661 = vmax.f32 %v1597, 0.0
    %v1662 = vmax.f32 %v1598, 0.0
    %v1663 = vmax.f32 %v1599, 0.0
    %v1664 = vmax.f32 %v1600, 0.0
    %v1665 = vmax.f32 %v1601, 0.0
    %v1666 = vmax.f32 %v1602, 0.0
    %v1667 = vmax.f32 %v1603, 0.0
    %v1668 = vmax.f32 %v1604, 0.0
    %v1669 = vmax.f32 %v1605, 0.0
    %v1670 = vmax.f32 %v1606, 0.0
    %v1671 = vmax.f32 %v1607, 0.0
    %v1672 = vmax.f32 %v1608, 0.0
    %v1673 = vmax.f32 %v1609, 0.0
    %v1674 = vmax.f32 %v1610, 0.0
    %v1675 = vmax.f32 %v1611, 0.0
    %v1676 = vmax.f32 %v1612, 0.0
    %v1677 = vmax.f32 %v1613, 0.0
    %v1678 = vmax.f32 %v1614, 0.0
    %v1679 = vmax.f32 %v1615, 0.0
    %v1680 = vmax.f32 %v1616, 0.0
    %v1681 = vmax.f32 %v1617, 0.0
    %v1682 = vmax.f32 %v1618, 0.0
    %v1683 = vmax.f32 %v1619, 0.0
    %v1684 = vmax.f32 %v1620, 0.0
    %v1685 = vmax.f32 %v1621, 0.0
    %v1686 = vmax.f32 %v1622, 0.0
    %v1687 = vmax.f32 %v1623, 0.0
    %v1688 = vmax.f32 %v1624, 0.0
    %v1689 = vmax.f32 %v1625, 0.0
    %v1690 = vmax.f32 %v1626, 0.0
    %v1691 = vmax.f32 %v1627, 0.0
    %v1692 = vmax.f32 %v1628, 0.0
    %v1693 = vmax.f32 %v1629, 0.0
    %v1694 = vmax.f32 %v1630, 0.0
    %v1695 = vmax.f32 %v1631, 0.0
    %v1696 = vmax.f32 %v1632, 0.0
    %v1697 = vmax.f32 %v1633, 0.0
    %v1698 = vmax.f32 %v1634, 0.0
    %v1699 = vmax.f32 %v1635, 0.0
    %v1700 = vmax.f32 %v1636, 0.0
    %v1701 = vmax.f32 %v1637, 0.0
    %v1702 = vmax.f32 %v1638, 0.0
    %v1703 = vmax.f32 %v1639, 0.0
    %v1704 = vmax.f32 %v1640, 0.0
    %v1705 = vmax.f32 %v1641, 0.0
    %v1706 = vmax.f32 %v1642, 0.0
    %v1707 = vmax.f32 %v1643, 0.0
    %v1708 = vmax.f32 %v1644, 0.0
    %v1709 = vmax.f32 %v1645, 0.0
    %v1710 = vmax.f32 %v1646, 0.0
    %vm1711 = vcmask 1045504
    %v1712 = vsel %vm1711, %v1647, -inf
    %v1713 = vrot.slane %v1712, 4
    %v1714 = vmax.f32 %v1712, %v1713
    %v1715 = vrot.slane %v1714, 2
    %v1716 = vmax.f32 %v1714, %v1715
    %v1717 = vrot.slane %v1716, 1
    %v1718 = vmax.f32 %v1716, %v1717
    %v1719 = vsel %vm1711, %v1651, -inf
    %v1720 = vrot.slane %v1719, 4
    %v1721 = vmax.f32 %v1719, %v1720
    %v1722 = vrot.slane %v1721, 2
    %v1723 = vmax.f32 %v1721, %v1722
    %v1724 = vrot.slane %v1723, 1
    %v1725 = vmax.f32 %v1723, %v1724
    %v1726 = vsel %vm1711, %v1655, -inf
    %v1727 = vrot.slane %v1726, 4
    %v1728 = vmax.f32 %v1726, %v1727
    %v1729 = vrot.slane %v1728, 2
    %v1730 = vmax.f32 %v1728, %v1729
    %v1731 = vrot.slane %v1730, 1
    %v1732 = vmax.f32 %v1730, %v1731
    %v1733 = vsel %vm1711, %v1659, -inf
    %v1734 = vrot.slane %v1733, 4
    %v1735 = vmax.f32 %v1733, %v1734
    %v1736 = vrot.slane %v1735, 2
    %v1737 = vmax.f32 %v1735, %v1736
    %v1738 = vrot.slane %v1737, 1
    %v1739 = vmax.f32 %v1737, %v1738
    %v1740 = vsel %vm1711, %v1663, -inf
    %v1741 = vrot.slane %v1740, 4
    %v1742 = vmax.f32 %v1740, %v1741
    %v1743 = vrot.slane %v1742, 2
    %v1744 = vmax.f32 %v1742, %v1743
    %v1745 = vrot.slane %v1744, 1
    %v1746 = vmax.f32 %v1744, %v1745
    %v1747 = vsel %vm1711, %v1667, -inf
    %v1748 = vrot.slane %v1747, 4
    %v1749 = vmax.f32 %v1747, %v1748
    %v1750 = vrot.slane %v1749, 2
    %v1751 = vmax.f32 %v1749, %v1750
    %v1752 = vrot.slane %v1751, 1
    %v1753 = vmax.f32 %v1751, %v1752
    %v1754 = vsel %vm1711, %v1671, -inf
    %v1755 = vrot.slane %v1754, 4
    %v1756 = vmax.f32 %v1754, %v1755
    %v1757 = vrot.slane %v1756, 2
    %v1758 = vmax.f32 %v1756, %v1757
    %v1759 = vrot.slane %v1758, 1
    %v1760 = vmax.f32 %v1758, %v1759
    %v1761 = vsel %vm1711, %v1675, -inf
    %v1762 = vrot.slane %v1761, 4
    %v1763 = vmax.f32 %v1761, %v1762
    %v1764 = vrot.slane %v1763, 2
    %v1765 = vmax.f32 %v1763, %v1764
    %v1766 = vrot.slane %v1765, 1
    %v1767 = vmax.f32 %v1765, %v1766
    %v1768 = vsel %vm1711, %v1679, -inf
    %v1769 = vrot.slane %v1768, 4
    %v1770 = vmax.f32 %v1768, %v1769
    %v1771 = vrot.slane %v1770, 2
    %v1772 = vmax.f32 %v1770, %v1771
    %v1773 = vrot.slane %v1772, 1
    %v1774 = vmax.f32 %v1772, %v1773
    %v1775 = vsel %vm1711, %v1683, -inf
    %v1776 = vrot.slane %v1775, 4
    %v1777 = vmax.f32 %v1775, %v1776
    %v1778 = vrot.slane %v1777, 2
    %v1779 = vmax.f32 %v1777, %v1778
    %v1780 = vrot.slane %v1779, 1
    %v1781 = vmax.f32 %v1779, %v1780
    %v1782 = vsel %vm1711, %v1687, -inf
    %v1783 = vrot.slane %v1782, 4
    %v1784 = vmax.f32 %v1782, %v1783
    %v1785 = vrot.slane %v1784, 2
    %v1786 = vmax.f32 %v1784, %v1785
    %v1787 = vrot.slane %v1786, 1
    %v1788 = vmax.f32 %v1786, %v1787
    %v1789 = vsel %vm1711, %v1691, -inf
    %v1790 = vrot.slane %v1789, 4
    %v1791 = vmax.f32 %v1789, %v1790
    %v1792 = vrot.slane %v1791, 2
    %v1793 = vmax.f32 %v1791, %v1792
    %v1794 = vrot.slane %v1793, 1
    %v1795 = vmax.f32 %v1793, %v1794
    %v1796 = vsel %vm1711, %v1695, -inf
    %v1797 = vrot.slane %v1796, 4
    %v1798 = vmax.f32 %v1796, %v1797
    %v1799 = vrot.slane %v1798, 2
    %v1800 = vmax.f32 %v1798, %v1799
    %v1801 = vrot.slane %v1800, 1
    %v1802 = vmax.f32 %v1800, %v1801
    %v1803 = vsel %vm1711, %v1699, -inf
    %v1804 = vrot.slane %v1803, 4
    %v1805 = vmax.f32 %v1803, %v1804
    %v1806 = vrot.slane %v1805, 2
    %v1807 = vmax.f32 %v1805, %v1806
    %v1808 = vrot.slane %v1807, 1
    %v1809 = vmax.f32 %v1807, %v1808
    %v1810 = vsel %vm1711, %v1703, -inf
    %v1811 = vrot.slane %v1810, 4
    %v1812 = vmax.f32 %v1810, %v1811
    %v1813 = vrot.slane %v1812, 2
    %v1814 = vmax.f32 %v1812, %v1813
    %v1815 = vrot.slane %v1814, 1
    %v1816 = vmax.f32 %v1814, %v1815
    %v1817 = vsel %vm1711, %v1707, -inf
    %v1818 = vrot.slane %v1817, 4
    %v1819 = vmax.f32 %v1817, %v1818
    %v1820 = vrot.slane %v1819, 2
    %v1821 = vmax.f32 %v1819, %v1820
    %v1822 = vrot.slane %v1821, 1
    %v1823 = vmax.f32 %v1821, %v1822
    %vm1824 = vcmask 1047557
    %v1825 = vsel %vm1824, %v1647, -inf
    %vm1826 = vcmask 1042432
    %v1827 = vsel %vm1826, %v1648, -inf
    %v1828 = vmax.f32 %v1825, %v1827
    %v1829 = vrot.slane %v1828, 4
    %v1830 = vmax.f32 %v1828, %v1829
    %v1831 = vrot.slane %v1830, 2
    %v1832 = vmax.f32 %v1830, %v1831
    %v1833 = vrot.slane %v1832, 1
    %v1834 = vmax.f32 %v1832, %v1833
    %v1835 = vsel %vm1824, %v1651, -inf
    %v1836 = vsel %vm1826, %v1652, -inf
    %v1837 = vmax.f32 %v1835, %v1836
    %v1838 = vrot.slane %v1837, 4
    %v1839 = vmax.f32 %v1837, %v1838
    %v1840 = vrot.slane %v1839, 2
    %v1841 = vmax.f32 %v1839, %v1840
    %v1842 = vrot.slane %v1841, 1
    %v1843 = vmax.f32 %v1841, %v1842
    %v1844 = vsel %vm1824, %v1655, -inf
    %v1845 = vsel %vm1826, %v1656, -inf
    %v1846 = vmax.f32 %v1844, %v1845
    %v1847 = vrot.slane %v1846, 4
    %v1848 = vmax.f32 %v1846, %v1847
    %v1849 = vrot.slane %v1848, 2
    %v1850 = vmax.f32 %v1848, %v1849
    %v1851 = vrot.slane %v1850, 1
    %v1852 = vmax.f32 %v1850, %v1851
    %v1853 = vsel %vm1824, %v1659, -inf
    %v1854 = vsel %vm1826, %v1660, -inf
    %v1855 = vmax.f32 %v1853, %v1854
    %v1856 = vrot.slane %v1855, 4
    %v1857 = vmax.f32 %v1855, %v1856
    %v1858 = vrot.slane %v1857, 2
    %v1859 = vmax.f32 %v1857, %v1858
    %v1860 = vrot.slane %v1859, 1
    %v1861 = vmax.f32 %v1859, %v1860
    %v1862 = vsel %vm1824, %v1663, -inf
    %v1863 = vsel %vm1826, %v1664, -inf
    %v1864 = vmax.f32 %v1862, %v1863
    %v1865 = vrot.slane %v1864, 4
    %v1866 = vmax.f32 %v1864, %v1865
    %v1867 = vrot.slane %v1866, 2
    %v1868 = vmax.f32 %v1866, %v1867
    %v1869 = vrot.slane %v1868, 1
    %v1870 = vmax.f32 %v1868, %v1869
    %v1871 = vsel %vm1824, %v1667, -inf
    %v1872 = vsel %vm1826, %v1668, -inf
    %v1873 = vmax.f32 %v1871, %v1872
    %v1874 = vrot.slane %v1873, 4
    %v1875 = vmax.f32 %v1873, %v1874
    %v1876 = vrot.slane %v1875, 2
    %v1877 = vmax.f32 %v1875, %v1876
    %v1878 = vrot.slane %v1877, 1
    %v1879 = vmax.f32 %v1877, %v1878
    %v1880 = vsel %vm1824, %v1671, -inf
    %v1881 = vsel %vm1826, %v1672, -inf
    %v1882 = vmax.f32 %v1880, %v1881
    %v1883 = vrot.slane %v1882, 4
    %v1884 = vmax.f32 %v1882, %v1883
    %v1885 = vrot.slane %v1884, 2
    %v1886 = vmax.f32 %v1884, %v1885
    %v1887 = vrot.slane %v1886, 1
    %v1888 = vmax.f32 %v1886, %v1887
    %v1889 = vsel %vm1824, %v1675, -inf
    %v1890 = vsel %vm1826, %v1676, -inf
    %v1891 = vmax.f32 %v1889, %v1890
    %v1892 = vrot.slane %v1891, 4
    %v1893 = vmax.f32 %v1891, %v1892
    %v1894 = vrot.slane %v1893, 2
    %v1895 = vmax.f32 %v1893, %v1894
    %v1896 = vrot.slane %v1895, 1
    %v1897 = vmax.f32 %v1895, %v1896
    %v1898 = vsel %vm1824, %v1679, -inf
    %v1899 = vsel %vm1826, %v1680, -inf
    %v1900 = vmax.f32 %v1898, %v1899
    %v1901 = vrot.slane %v1900, 4
    %v1902 = vmax.f32 %v1900, %v1901
    %v1903 = vrot.slane %v1902, 2
    %v1904 = vmax.f32 %v1902, %v1903
    %v1905 = vrot.slane %v1904, 1
    %v1906 = vmax.f32 %v1904, %v1905
    %v1907 = vsel %vm1824, %v1683, -inf
    %v1908 = vsel %vm1826, %v1684, -inf
    %v1909 = vmax.f32 %v1907, %v1908
    %v1910 = vrot.slane %v1909, 4
    %v1911 = vmax.f32 %v1909, %v1910
    %v1912 = vrot.slane %v1911, 2
    %v1913 = vmax.f32 %v1911, %v1912
    %v1914 = vrot.slane %v1913, 1
    %v1915 = vmax.f32 %v1913, %v1914
    %v1916 = vsel %vm1824, %v1687, -inf
    %v1917 = vsel %vm1826, %v1688, -inf
    %v1918 = vmax.f32 %v1916, %v1917
    %v1919 = vrot.slane %v1918, 4
    %v1920 = vmax.f32 %v1918, %v1919
    %v1921 = vrot.slane %v1920, 2
    %v1922 = vmax.f32 %v1920, %v1921
    %v1923 = vrot.slane %v1922, 1
    %v1924 = vmax.f32 %v1922, %v1923
    %v1925 = vsel %vm1824, %v1691, -inf
    %v1926 = vsel %vm1826, %v1692, -inf
    %v1927 = vmax.f32 %v1925, %v1926
    %v1928 = vrot.slane %v1927, 4
    %v1929 = vmax.f32 %v1927, %v1928
    %v1930 = vrot.slane %v1929, 2
    %v1931 = vmax.f32 %v1929, %v1930
    %v1932 = vrot.slane %v1931, 1
    %v1933 = vmax.f32 %v1931, %v1932
    %v1934 = vsel %vm1824, %v1695, -inf
    %v1935 = vsel %vm1826, %v1696, -inf
    %v1936 = vmax.f32 %v1934, %v1935
    %v1937 = vrot.slane %v1936, 4
    %v1938 = vmax.f32 %v1936, %v1937
    %v1939 = vrot.slane %v1938, 2
    %v1940 = vmax.f32 %v1938, %v1939
    %v1941 = vrot.slane %v1940, 1
    %v1942 = vmax.f32 %v1940, %v1941
    %v1943 = vsel %vm1824, %v1699, -inf
    %v1944 = vsel %vm1826, %v1700, -inf
    %v1945 = vmax.f32 %v1943, %v1944
    %v1946 = vrot.slane %v1945, 4
    %v1947 = vmax.f32 %v1945, %v1946
    %v1948 = vrot.slane %v1947, 2
    %v1949 = vmax.f32 %v1947, %v1948
    %v1950 = vrot.slane %v1949, 1
    %v1951 = vmax.f32 %v1949, %v1950
    %v1952 = vsel %vm1824, %v1703, -inf
    %v1953 = vsel %vm1826, %v1704, -inf
    %v1954 = vmax.f32 %v1952, %v1953
    %v1955 = vrot.slane %v1954, 4
    %v1956 = vmax.f32 %v1954, %v1955
    %v1957 = vrot.slane %v1956, 2
    %v1958 = vmax.f32 %v1956, %v1957
    %v1959 = vrot.slane %v1958, 1
    %v1960 = vmax.f32 %v1958, %v1959
    %v1961 = vsel %vm1824, %v1707, -inf
    %v1962 = vsel %vm1826, %v1708, -inf
    %v1963 = vmax.f32 %v1961, %v1962
    %v1964 = vrot.slane %v1963, 4
    %v1965 = vmax.f32 %v1963, %v1964
    %v1966 = vrot.slane %v1965, 2
    %v1967 = vmax.f32 %v1965, %v1966
    %v1968 = vrot.slane %v1967, 1
    %v1969 = vmax.f32 %v1967, %v1968
    %vm1970 = vcmask 1047554
    %v1971 = vsel %vm1970, %v1648, -inf
    %v1972 = vrot.slane %v1971, 4
    %v1973 = vmax.f32 %v1971, %v1972
    %v1974 = vrot.slane %v1973, 2
    %v1975 = vmax.f32 %v1973, %v1974
    %v1976 = vrot.slane %v1975, 1
    %v1977 = vmax.f32 %v1975, %v1976
    %v1978 = vsel %vm1970, %v1652, -inf
    %v1979 = vrot.slane %v1978, 4
    %v1980 = vmax.f32 %v1978, %v1979
    %v1981 = vrot.slane %v1980, 2
    %v1982 = vmax.f32 %v1980, %v1981
    %v1983 = vrot.slane %v1982, 1
    %v1984 = vmax.f32 %v1982, %v1983
    %v1985 = vsel %vm1970, %v1656, -inf
    %v1986 = vrot.slane %v1985, 4
    %v1987 = vmax.f32 %v1985, %v1986
    %v1988 = vrot.slane %v1987, 2
    %v1989 = vmax.f32 %v1987, %v1988
    %v1990 = vrot.slane %v1989, 1
    %v1991 = vmax.f32 %v1989, %v1990
    %v1992 = vsel %vm1970, %v1660, -inf
    %v1993 = vrot.slane %v1992, 4
    %v1994 = vmax.f32 %v1992, %v1993
    %v1995 = vrot.slane %v1994, 2
    %v1996 = vmax.f32 %v1994, %v1995
    %v1997 = vrot.slane %v1996, 1
    %v1998 = vmax.f32 %v1996, %v1997
    %v1999 = vsel %vm1970, %v1664, -inf
    %v2000 = vrot.slane %v1999, 4
    %v2001 = vmax.f32 %v1999, %v2000
    %v2002 = vrot.slane %v2001, 2
    %v2003 = vmax.f32 %v2001, %v2002
    %v2004 = vrot.slane %v2003, 1
    %v2005 = vmax.f32 %v2003, %v2004
    %v2006 = vsel %vm1970, %v1668, -inf
    %v2007 = vrot.slane %v2006, 4
    %v2008 = vmax.f32 %v2006, %v2007
    %v2009 = vrot.slane %v2008, 2
    %v2010 = vmax.f32 %v2008, %v2009
    %v2011 = vrot.slane %v2010, 1
    %v2012 = vmax.f32 %v2010, %v2011
    %v2013 = vsel %vm1970, %v1672, -inf
    %v2014 = vrot.slane %v2013, 4
    %v2015 = vmax.f32 %v2013, %v2014
    %v2016 = vrot.slane %v2015, 2
    %v2017 = vmax.f32 %v2015, %v2016
    %v2018 = vrot.slane %v2017, 1
    %v2019 = vmax.f32 %v2017, %v2018
    %v2020 = vsel %vm1970, %v1676, -inf
    %v2021 = vrot.slane %v2020, 4
    %v2022 = vmax.f32 %v2020, %v2021
    %v2023 = vrot.slane %v2022, 2
    %v2024 = vmax.f32 %v2022, %v2023
    %v2025 = vrot.slane %v2024, 1
    %v2026 = vmax.f32 %v2024, %v2025
    %v2027 = vsel %vm1970, %v1680, -inf
    %v2028 = vrot.slane %v2027, 4
    %v2029 = vmax.f32 %v2027, %v2028
    %v2030 = vrot.slane %v2029, 2
    %v2031 = vmax.f32 %v2029, %v2030
    %v2032 = vrot.slane %v2031, 1
    %v2033 = vmax.f32 %v2031, %v2032
    %v2034 = vsel %vm1970, %v1684, -inf
    %v2035 = vrot.slane %v2034, 4
    %v2036 = vmax.f32 %v2034, %v2035
    %v2037 = vrot.slane %v2036, 2
    %v2038 = vmax.f32 %v2036, %v2037
    %v2039 = vrot.slane %v2038, 1
    %v2040 = vmax.f32 %v2038, %v2039
    %v2041 = vsel %vm1970, %v1688, -inf
    %v2042 = vrot.slane %v2041, 4
    %v2043 = vmax.f32 %v2041, %v2042
    %v2044 = vrot.slane %v2043, 2
    %v2045 = vmax.f32 %v2043, %v2044
    %v2046 = vrot.slane %v2045, 1
    %v2047 = vmax.f32 %v2045, %v2046
    %v2048 = vsel %vm1970, %v1692, -inf
    %v2049 = vrot.slane %v2048, 4
    %v2050 = vmax.f32 %v2048, %v2049
    %v2051 = vrot.slane %v2050, 2
    %v2052 = vmax.f32 %v2050, %v2051
    %v2053 = vrot.slane %v2052, 1
    %v2054 = vmax.f32 %v2052, %v2053
    %v2055 = vsel %vm1970, %v1696, -inf
    %v2056 = vrot.slane %v2055, 4
    %v2057 = vmax.f32 %v2055, %v2056
    %v2058 = vrot.slane %v2057, 2
    %v2059 = vmax.f32 %v2057, %v2058
    %v2060 = vrot.slane %v2059, 1
    %v2061 = vmax.f32 %v2059, %v2060
    %v2062 = vsel %vm1970, %v1700, -inf
    %v2063 = vrot.slane %v2062, 4
    %v2064 = vmax.f32 %v2062, %v2063
    %v2065 = vrot.slane %v2064, 2
    %v2066 = vmax.f32 %v2064, %v2065
    %v2067 = vrot.slane %v2066, 1
    %v2068 = vmax.f32 %v2066, %v2067
    %v2069 = vsel %vm1970, %v1704, -inf
    %v2070 = vrot.slane %v2069, 4
    %v2071 = vmax.f32 %v2069, %v2070
    %v2072 = vrot.slane %v2071, 2
    %v2073 = vmax.f32 %v2071, %v2072
    %v2074 = vrot.slane %v2073, 1
    %v2075 = vmax.f32 %v2073, %v2074
    %v2076 = vsel %vm1970, %v1708, -inf
    %v2077 = vrot.slane %v2076, 4
    %v2078 = vmax.f32 %v2076, %v2077
    %v2079 = vrot.slane %v2078, 2
    %v2080 = vmax.f32 %v2078, %v2079
    %v2081 = vrot.slane %v2080, 1
    %v2082 = vmax.f32 %v2080, %v2081
    %vm2083 = vcmask 1047559
    %v2084 = vsel %vm2083, %v1648, -inf
    %vm2085 = vcmask 1044480
    %v2086 = vsel %vm2085, %v1649, -inf
    %v2087 = vmax.f32 %v2084, %v2086
    %v2088 = vrot.slane %v2087, 4
    %v2089 = vmax.f32 %v2087, %v2088
    %v2090 = vrot.slane %v2089, 2
    %v2091 = vmax.f32 %v2089, %v2090
    %v2092 = vrot.slane %v2091, 1
    %v2093 = vmax.f32 %v2091, %v2092
    %v2094 = vsel %vm2083, %v1652, -inf
    %v2095 = vsel %vm2085, %v1653, -inf
    %v2096 = vmax.f32 %v2094, %v2095
    %v2097 = vrot.slane %v2096, 4
    %v2098 = vmax.f32 %v2096, %v2097
    %v2099 = vrot.slane %v2098, 2
    %v2100 = vmax.f32 %v2098, %v2099
    %v2101 = vrot.slane %v2100, 1
    %v2102 = vmax.f32 %v2100, %v2101
    %v2103 = vsel %vm2083, %v1656, -inf
    %v2104 = vsel %vm2085, %v1657, -inf
    %v2105 = vmax.f32 %v2103, %v2104
    %v2106 = vrot.slane %v2105, 4
    %v2107 = vmax.f32 %v2105, %v2106
    %v2108 = vrot.slane %v2107, 2
    %v2109 = vmax.f32 %v2107, %v2108
    %v2110 = vrot.slane %v2109, 1
    %v2111 = vmax.f32 %v2109, %v2110
    %v2112 = vsel %vm2083, %v1660, -inf
    %v2113 = vsel %vm2085, %v1661, -inf
    %v2114 = vmax.f32 %v2112, %v2113
    %v2115 = vrot.slane %v2114, 4
    %v2116 = vmax.f32 %v2114, %v2115
    %v2117 = vrot.slane %v2116, 2
    %v2118 = vmax.f32 %v2116, %v2117
    %v2119 = vrot.slane %v2118, 1
    %v2120 = vmax.f32 %v2118, %v2119
    %v2121 = vsel %vm2083, %v1664, -inf
    %v2122 = vsel %vm2085, %v1665, -inf
    %v2123 = vmax.f32 %v2121, %v2122
    %v2124 = vrot.slane %v2123, 4
    %v2125 = vmax.f32 %v2123, %v2124
    %v2126 = vrot.slane %v2125, 2
    %v2127 = vmax.f32 %v2125, %v2126
    %v2128 = vrot.slane %v2127, 1
    %v2129 = vmax.f32 %v2127, %v2128
    %v2130 = vsel %vm2083, %v1668, -inf
    %v2131 = vsel %vm2085, %v1669, -inf
    %v2132 = vmax.f32 %v2130, %v2131
    %v2133 = vrot.slane %v2132, 4
    %v2134 = vmax.f32 %v2132, %v2133
    %v2135 = vrot.slane %v2134, 2
    %v2136 = vmax.f32 %v2134, %v2135
    %v2137 = vrot.slane %v2136, 1
    %v2138 = vmax.f32 %v2136, %v2137
    %v2139 = vsel %vm2083, %v1672, -inf
    %v2140 = vsel %vm2085, %v1673, -inf
    %v2141 = vmax.f32 %v2139, %v2140
    %v2142 = vrot.slane %v2141, 4
    %v2143 = vmax.f32 %v2141, %v2142
    %v2144 = vrot.slane %v2143, 2
    %v2145 = vmax.f32 %v2143, %v2144
    %v2146 = vrot.slane %v2145, 1
    %v2147 = vmax.f32 %v2145, %v2146
    %v2148 = vsel %vm2083, %v1676, -inf
    %v2149 = vsel %vm2085, %v1677, -inf
    %v2150 = vmax.f32 %v2148, %v2149
    %v2151 = vrot.slane %v2150, 4
    %v2152 = vmax.f32 %v2150, %v2151
    %v2153 = vrot.slane %v2152, 2
    %v2154 = vmax.f32 %v2152, %v2153
    %v2155 = vrot.slane %v2154, 1
    %v2156 = vmax.f32 %v2154, %v2155
    %v2157 = vsel %vm2083, %v1680, -inf
    %v2158 = vsel %vm2085, %v1681, -inf
    %v2159 = vmax.f32 %v2157, %v2158
    %v2160 = vrot.slane %v2159, 4
    %v2161 = vmax.f32 %v2159, %v2160
    %v2162 = vrot.slane %v2161, 2
    %v2163 = vmax.f32 %v2161, %v2162
    %v2164 = vrot.slane %v2163, 1
    %v2165 = vmax.f32 %v2163, %v2164
    %v2166 = vsel %vm2083, %v1684, -inf
    %v2167 = vsel %vm2085, %v1685, -inf
    %v2168 = vmax.f32 %v2166, %v2167
    %v2169 = vrot.slane %v2168, 4
    %v2170 = vmax.f32 %v2168, %v2169
    %v2171 = vrot.slane %v2170, 2
    %v2172 = vmax.f32 %v2170, %v2171
    %v2173 = vrot.slane %v2172, 1
    %v2174 = vmax.f32 %v2172, %v2173
    %v2175 = vsel %vm2083, %v1688, -inf
    %v2176 = vsel %vm2085, %v1689, -inf
    %v2177 = vmax.f32 %v2175, %v2176
    %v2178 = vrot.slane %v2177, 4
    %v2179 = vmax.f32 %v2177, %v2178
    %v2180 = vrot.slane %v2179, 2
    %v2181 = vmax.f32 %v2179, %v2180
    %v2182 = vrot.slane %v2181, 1
    %v2183 = vmax.f32 %v2181, %v2182
    %v2184 = vsel %vm2083, %v1692, -inf
    %v2185 = vsel %vm2085, %v1693, -inf
    %v2186 = vmax.f32 %v2184, %v2185
    %v2187 = vrot.slane %v2186, 4
    %v2188 = vmax.f32 %v2186, %v2187
    %v2189 = vrot.slane %v2188, 2
    %v2190 = vmax.f32 %v2188, %v2189
    %v2191 = vrot.slane %v2190, 1
    %v2192 = vmax.f32 %v2190, %v2191
    %v2193 = vsel %vm2083, %v1696, -inf
    %v2194 = vsel %vm2085, %v1697, -inf
    %v2195 = vmax.f32 %v2193, %v2194
    %v2196 = vrot.slane %v2195, 4
    %v2197 = vmax.f32 %v2195, %v2196
    %v2198 = vrot.slane %v2197, 2
    %v2199 = vmax.f32 %v2197, %v2198
    %v2200 = vrot.slane %v2199, 1
    %v2201 = vmax.f32 %v2199, %v2200
    %v2202 = vsel %vm2083, %v1700, -inf
    %v2203 = vsel %vm2085, %v1701, -inf
    %v2204 = vmax.f32 %v2202, %v2203
    %v2205 = vrot.slane %v2204, 4
    %v2206 = vmax.f32 %v2204, %v2205
    %v2207 = vrot.slane %v2206, 2
    %v2208 = vmax.f32 %v2206, %v2207
    %v2209 = vrot.slane %v2208, 1
    %v2210 = vmax.f32 %v2208, %v2209
    %v2211 = vsel %vm2083, %v1704, -inf
    %v2212 = vsel %vm2085, %v1705, -inf
    %v2213 = vmax.f32 %v2211, %v2212
    %v2214 = vrot.slane %v2213, 4
    %v2215 = vmax.f32 %v2213, %v2214
    %v2216 = vrot.slane %v2215, 2
    %v2217 = vmax.f32 %v2215, %v2216
    %v2218 = vrot.slane %v2217, 1
    %v2219 = vmax.f32 %v2217, %v2218
    %v2220 = vsel %vm2083, %v1708, -inf
    %v2221 = vsel %vm2085, %v1709, -inf
    %v2222 = vmax.f32 %v2220, %v2221
    %v2223 = vrot.slane %v2222, 4
    %v2224 = vmax.f32 %v2222, %v2223
    %v2225 = vrot.slane %v2224, 2
    %v2226 = vmax.f32 %v2224, %v2225
    %v2227 = vrot.slane %v2226, 1
    %v2228 = vmax.f32 %v2226, %v2227
    %vm2229 = vcmask 1047556
    %v2230 = vsel %vm2229, %v1649, -inf
    %vm2231 = vcmask 1041408
    %v2232 = vsel %vm2231, %v1650, -inf
    %v2233 = vmax.f32 %v2230, %v2232
    %v2234 = vrot.slane %v2233, 4
    %v2235 = vmax.f32 %v2233, %v2234
    %v2236 = vrot.slane %v2235, 2
    %v2237 = vmax.f32 %v2235, %v2236
    %v2238 = vrot.slane %v2237, 1
    %v2239 = vmax.f32 %v2237, %v2238
    %v2240 = vsel %vm2229, %v1653, -inf
    %v2241 = vsel %vm2231, %v1654, -inf
    %v2242 = vmax.f32 %v2240, %v2241
    %v2243 = vrot.slane %v2242, 4
    %v2244 = vmax.f32 %v2242, %v2243
    %v2245 = vrot.slane %v2244, 2
    %v2246 = vmax.f32 %v2244, %v2245
    %v2247 = vrot.slane %v2246, 1
    %v2248 = vmax.f32 %v2246, %v2247
    %v2249 = vsel %vm2229, %v1657, -inf
    %v2250 = vsel %vm2231, %v1658, -inf
    %v2251 = vmax.f32 %v2249, %v2250
    %v2252 = vrot.slane %v2251, 4
    %v2253 = vmax.f32 %v2251, %v2252
    %v2254 = vrot.slane %v2253, 2
    %v2255 = vmax.f32 %v2253, %v2254
    %v2256 = vrot.slane %v2255, 1
    %v2257 = vmax.f32 %v2255, %v2256
    %v2258 = vsel %vm2229, %v1661, -inf
    %v2259 = vsel %vm2231, %v1662, -inf
    %v2260 = vmax.f32 %v2258, %v2259
    %v2261 = vrot.slane %v2260, 4
    %v2262 = vmax.f32 %v2260, %v2261
    %v2263 = vrot.slane %v2262, 2
    %v2264 = vmax.f32 %v2262, %v2263
    %v2265 = vrot.slane %v2264, 1
    %v2266 = vmax.f32 %v2264, %v2265
    %v2267 = vsel %vm2229, %v1665, -inf
    %v2268 = vsel %vm2231, %v1666, -inf
    %v2269 = vmax.f32 %v2267, %v2268
    %v2270 = vrot.slane %v2269, 4
    %v2271 = vmax.f32 %v2269, %v2270
    %v2272 = vrot.slane %v2271, 2
    %v2273 = vmax.f32 %v2271, %v2272
    %v2274 = vrot.slane %v2273, 1
    %v2275 = vmax.f32 %v2273, %v2274
    %v2276 = vsel %vm2229, %v1669, -inf
    %v2277 = vsel %vm2231, %v1670, -inf
    %v2278 = vmax.f32 %v2276, %v2277
    %v2279 = vrot.slane %v2278, 4
    %v2280 = vmax.f32 %v2278, %v2279
    %v2281 = vrot.slane %v2280, 2
    %v2282 = vmax.f32 %v2280, %v2281
    %v2283 = vrot.slane %v2282, 1
    %v2284 = vmax.f32 %v2282, %v2283
    %v2285 = vsel %vm2229, %v1673, -inf
    %v2286 = vsel %vm2231, %v1674, -inf
    %v2287 = vmax.f32 %v2285, %v2286
    %v2288 = vrot.slane %v2287, 4
    %v2289 = vmax.f32 %v2287, %v2288
    %v2290 = vrot.slane %v2289, 2
    %v2291 = vmax.f32 %v2289, %v2290
    %v2292 = vrot.slane %v2291, 1
    %v2293 = vmax.f32 %v2291, %v2292
    %v2294 = vsel %vm2229, %v1677, -inf
    %v2295 = vsel %vm2231, %v1678, -inf
    %v2296 = vmax.f32 %v2294, %v2295
    %v2297 = vrot.slane %v2296, 4
    %v2298 = vmax.f32 %v2296, %v2297
    %v2299 = vrot.slane %v2298, 2
    %v2300 = vmax.f32 %v2298, %v2299
    %v2301 = vrot.slane %v2300, 1
    %v2302 = vmax.f32 %v2300, %v2301
    %v2303 = vsel %vm2229, %v1681, -inf
    %v2304 = vsel %vm2231, %v1682, -inf
    %v2305 = vmax.f32 %v2303, %v2304
    %v2306 = vrot.slane %v2305, 4
    %v2307 = vmax.f32 %v2305, %v2306
    %v2308 = vrot.slane %v2307, 2
    %v2309 = vmax.f32 %v2307, %v2308
    %v2310 = vrot.slane %v2309, 1
    %v2311 = vmax.f32 %v2309, %v2310
    %v2312 = vsel %vm2229, %v1685, -inf
    %v2313 = vsel %vm2231, %v1686, -inf
    %v2314 = vmax.f32 %v2312, %v2313
    %v2315 = vrot.slane %v2314, 4
    %v2316 = vmax.f32 %v2314, %v2315
    %v2317 = vrot.slane %v2316, 2
    %v2318 = vmax.f32 %v2316, %v2317
    %v2319 = vrot.slane %v2318, 1
    %v2320 = vmax.f32 %v2318, %v2319
    %v2321 = vsel %vm2229, %v1689, -inf
    %v2322 = vsel %vm2231, %v1690, -inf
    %v2323 = vmax.f32 %v2321, %v2322
    %v2324 = vrot.slane %v2323, 4
    %v2325 = vmax.f32 %v2323, %v2324
    %v2326 = vrot.slane %v2325, 2
    %v2327 = vmax.f32 %v2325, %v2326
    %v2328 = vrot.slane %v2327, 1
    %v2329 = vmax.f32 %v2327, %v2328
    %v2330 = vsel %vm2229, %v1693, -inf
    %v2331 = vsel %vm2231, %v1694, -inf
    %v2332 = vmax.f32 %v2330, %v2331
    %v2333 = vrot.slane %v2332, 4
    %v2334 = vmax.f32 %v2332, %v2333
    %v2335 = vrot.slane %v2334, 2
    %v2336 = vmax.f32 %v2334, %v2335
    %v2337 = vrot.slane %v2336, 1
    %v2338 = vmax.f32 %v2336, %v2337
    %v2339 = vsel %vm2229, %v1697, -inf
    %v2340 = vsel %vm2231, %v1698, -inf
    %v2341 = vmax.f32 %v2339, %v2340
    %v2342 = vrot.slane %v2341, 4
    %v2343 = vmax.f32 %v2341, %v2342
    %v2344 = vrot.slane %v2343, 2
    %v2345 = vmax.f32 %v2343, %v2344
    %v2346 = vrot.slane %v2345, 1
    %v2347 = vmax.f32 %v2345, %v2346
    %v2348 = vsel %vm2229, %v1701, -inf
    %v2349 = vsel %vm2231, %v1702, -inf
    %v2350 = vmax.f32 %v2348, %v2349
    %v2351 = vrot.slane %v2350, 4
    %v2352 = vmax.f32 %v2350, %v2351
    %v2353 = vrot.slane %v2352, 2
    %v2354 = vmax.f32 %v2352, %v2353
    %v2355 = vrot.slane %v2354, 1
    %v2356 = vmax.f32 %v2354, %v2355
    %v2357 = vsel %vm2229, %v1705, -inf
    %v2358 = vsel %vm2231, %v1706, -inf
    %v2359 = vmax.f32 %v2357, %v2358
    %v2360 = vrot.slane %v2359, 4
    %v2361 = vmax.f32 %v2359, %v2360
    %v2362 = vrot.slane %v2361, 2
    %v2363 = vmax.f32 %v2361, %v2362
    %v2364 = vrot.slane %v2363, 1
    %v2365 = vmax.f32 %v2363, %v2364
    %v2366 = vsel %vm2229, %v1709, -inf
    %v2367 = vsel %vm2231, %v1710, -inf
    %v2368 = vmax.f32 %v2366, %v2367
    %v2369 = vrot.slane %v2368, 4
    %v2370 = vmax.f32 %v2368, %v2369
    %v2371 = vrot.slane %v2370, 2
    %v2372 = vmax.f32 %v2370, %v2371
    %v2373 = vrot.slane %v2372, 1
    %v2374 = vmax.f32 %v2372, %v2373
    %vm2391 = vcmask 1041409
    %v2392 = vsel %vm2391, %v1725, %v1718
    %vm2393 = vcmask 1042434
    %v2394 = vsel %vm2393, %v1732, %v2392
    %vm2395 = vcmask 1043459
    %v2396 = vsel %vm2395, %v1739, %v2394
    %vm2397 = vcmask 1044484
    %v2398 = vsel %vm2397, %v1746, %v2396
    %vm2399 = vcmask 1045509
    %v2400 = vsel %vm2399, %v1753, %v2398
    %vm2401 = vcmask 1046534
    %v2402 = vsel %vm2401, %v1760, %v2400
    %v2403 = vsel %vm2083, %v1767, %v2402
    %v2404 = vsel %vm2391, %v1781, %v1774
    %v2405 = vsel %vm2393, %v1788, %v2404
    %v2406 = vsel %vm2395, %v1795, %v2405
    %v2407 = vsel %vm2397, %v1802, %v2406
    %v2408 = vsel %vm2399, %v1809, %v2407
    %v2409 = vsel %vm2401, %v1816, %v2408
    %v2410 = vsel %vm2083, %v1823, %v2409
    %v2429 = vsel %vm2391, %v1843, %v1834
    %v2430 = vsel %vm2393, %v1852, %v2429
    %v2431 = vsel %vm2395, %v1861, %v2430
    %v2432 = vsel %vm2397, %v1870, %v2431
    %v2433 = vsel %vm2399, %v1879, %v2432
    %v2434 = vsel %vm2401, %v1888, %v2433
    %v2435 = vsel %vm2083, %v1897, %v2434
    %v2436 = vsel %vm2391, %v1915, %v1906
    %v2437 = vsel %vm2393, %v1924, %v2436
    %v2438 = vsel %vm2395, %v1933, %v2437
    %v2439 = vsel %vm2397, %v1942, %v2438
    %v2440 = vsel %vm2399, %v1951, %v2439
    %v2441 = vsel %vm2401, %v1960, %v2440
    %v2442 = vsel %vm2083, %v1969, %v2441
    %v2461 = vsel %vm2391, %v1984, %v1977
    %v2462 = vsel %vm2393, %v1991, %v2461
    %v2463 = vsel %vm2395, %v1998, %v2462
    %v2464 = vsel %vm2397, %v2005, %v2463
    %v2465 = vsel %vm2399, %v2012, %v2464
    %v2466 = vsel %vm2401, %v2019, %v2465
    %v2467 = vsel %vm2083, %v2026, %v2466
    %v2468 = vsel %vm2391, %v2040, %v2033
    %v2469 = vsel %vm2393, %v2047, %v2468
    %v2470 = vsel %vm2395, %v2054, %v2469
    %v2471 = vsel %vm2397, %v2061, %v2470
    %v2472 = vsel %vm2399, %v2068, %v2471
    %v2473 = vsel %vm2401, %v2075, %v2472
    %v2474 = vsel %vm2083, %v2082, %v2473
    %v2493 = vsel %vm2391, %v2102, %v2093
    %v2494 = vsel %vm2393, %v2111, %v2493
    %v2495 = vsel %vm2395, %v2120, %v2494
    %v2496 = vsel %vm2397, %v2129, %v2495
    %v2497 = vsel %vm2399, %v2138, %v2496
    %v2498 = vsel %vm2401, %v2147, %v2497
    %v2499 = vsel %vm2083, %v2156, %v2498
    %v2500 = vsel %vm2391, %v2174, %v2165
    %v2501 = vsel %vm2393, %v2183, %v2500
    %v2502 = vsel %vm2395, %v2192, %v2501
    %v2503 = vsel %vm2397, %v2201, %v2502
    %v2504 = vsel %vm2399, %v2210, %v2503
    %v2505 = vsel %vm2401, %v2219, %v2504
    %v2506 = vsel %vm2083, %v2228, %v2505
    %v2525 = vsel %vm2391, %v2248, %v2239
    %v2526 = vsel %vm2393, %v2257, %v2525
    %v2527 = vsel %vm2395, %v2266, %v2526
    %v2528 = vsel %vm2397, %v2275, %v2527
    %v2529 = vsel %vm2399, %v2284, %v2528
    %v2530 = vsel %vm2401, %v2293, %v2529
    %v2531 = vsel %vm2083, %v2302, %v2530
    %v2532 = vsel %vm2391, %v2320, %v2311
    %v2533 = vsel %vm2393, %v2329, %v2532
    %v2534 = vsel %vm2395, %v2338, %v2533
    %v2535 = vsel %vm2397, %v2347, %v2534
    %v2536 = vsel %vm2399, %v2356, %v2535
    %v2537 = vsel %vm2401, %v2365, %v2536
    %v2538 = vsel %vm2083, %v2374, %v2537
    %v2541 = vld [vmem:[%s5] sm:$0xff]
    %v2542 = vld [vmem:[%s5 + $0x8] sm:$0xff]
    %v2543 = vld [vmem:[%s5 + $0x10] sm:$0xff]
    %v2544 = vld [vmem:[%s5 + $0x18] sm:$0x3f]
    %v2545 = vld [vmem:[%s6] sm:$0xff]
    %v2546 = vld [vmem:[%s6 + $0x8] sm:$0xff]
    %v2547 = vld [vmem:[%s6 + $0x10] sm:$0xff]
    %v2548 = vld [vmem:[%s6 + $0x18] sm:$0x3f]
    %vm2549 = vcmask 654336
    %v2551 = vsel %vm2549, %v2541, 0
    %v2554 = vsel %vm2549, %v2542, 0
    %v2557 = vsel %vm2549, %v2543, 0
    %v2560 = vsel %vm2549, %v2544, 0
    %2562 = vmatprep.subr.mxu0 0.0
    %2563 = vmatpush1.msra.mxu0 %v2403
    %2564 = vmatprep.subr.mxu0 0.0
    %2565 = vmatpush1.msra.mxu0 %v2410
    %2566 = vmatprep.subr.mxu0 0.0
    %2567 = vmatpush1.msra.mxu0 %v2435
    %2568 = vmatprep.subr.mxu0 0.0
    %2569 = vmatpush1.msra.mxu0 %v2442
    %2570 = vmatprep.subr.mxu0 0.0
    %2571 = vmatpush1.msra.mxu0 %v2467
    %2572 = vmatprep.subr.mxu0 0.0
    %2573 = vmatpush1.msra.mxu0 %v2474
    %2574 = vmatprep.subr.mxu0 0.0
    %2575 = vmatpush1.msra.mxu0 %v2499
    %2576 = vmatprep.subr.mxu0 0.0
    %2577 = vmatpush1.msra.mxu0 %v2506
    %2578 = vmatprep.subr.mxu0 0.0
    %2579 = vmatpush1.msra.mxu0 %v2531
    %2580 = vmatprep.subr.mxu0 0.0
    %2581 = vmatpush1.msra.mxu0 %v2538
    %2582 = vmatprep.subr.mxu0 0.0
    %2583 = vmatpush1.msra.mxu0 0.0
    %2584 = vmatprep.subr.mxu0 0.0
    %2585 = vmatpush1.msra.mxu0 0.0
    %2586 = vmatprep.subr.mxu0 0.0
    %2587 = vmatpush1.msra.mxu0 0.0
    %2588 = vmatprep.subr.mxu0 0.0
    %2589 = vmatpush1.msra.mxu0 0.0
    %2590 = vmatprep.subr.mxu0 0.0
    %2591 = vmatpush1.msra.mxu0 0.0
    %2592 = vmatprep.subr.mxu0 0.0
    %2593 = vmatpush1.msra.mxu0 0.0
    %2594 = vmatprep.subr.mxu0 0.0
    %2595 = vmatpush1.msra.mxu0 0.0
    %2596 = vmatprep.subr.mxu0 0.0
    %2597 = vmatpush1.msra.mxu0 0.0
    %2598 = vmatprep.subr.mxu0 0.0
    %2599 = vmatpush1.msra.mxu0 0.0
    %2600 = vmatprep.subr.mxu0 0.0
    %2601 = vmatpush1.msra.mxu0 0.0
    %2602 = vmatprep.subr.mxu0 0.0
    %2603 = vmatpush1.msra.mxu0 0.0
    %2604 = vmatprep.subr.mxu0 0.0
    %2605 = vmatpush1.msra.mxu0 0.0
    %2606 = vmatprep.subr.mxu0 0.0
    %2607 = vmatpush1.msra.mxu0 0.0
    %2608 = vmatprep.subr.mxu0 0.0
    %2609 = vmatpush1.msra.mxu0 0.0
    %2610 = vmatprep.subr.mxu0 0.0
    %2611 = vmatpush1.msra.mxu0 0.0
    %2612 = vmatprep.subr.mxu0 0.0
    %2613 = vmatpush1.msra.mxu0 0.0
    %2614 = vmatprep.subr.mxu0 0.0
    %2615 = vmatpush1.msra.mxu0 0.0
    %2616 = vmatprep.subr.mxu0 0.0
    %2617 = vmatpush1.msra.mxu0 0.0
    %2618 = vmatprep.subr.mxu0 0.0
    %2619 = vmatpush1.msra.mxu0 0.0
    %2620 = vmatprep.subr.mxu0 0.0
    %2621 = vmatpush1.msra.mxu0 0.0
    %2622 = vmatprep.subr.mxu0 0.0
    %2623 = vmatpush1.msra.mxu0 0.0
    %2624 = vmatprep.subr.mxu0 0.0
    %2625 = vmatpush1.msra.mxu0 0.0
    %2626 = vmatprep.mubr.f32.mxu0 0.0
    %2627 = vmatmul.mubr.f32.gmra.mrb[0].mxu0 %v2551
    %v2628 = vpop.f32.mrb[0].mxu0
    %v2629 = vadd.f32 %v2545, %v2628
    %v2630 = vpop.f32.mrb[0].mxu0
    %2631 = vmatprep.mubr.f32.mxu0 0.0
    %2632 = vmatmul.mubr.f32.gmra.mrb[0].mxu0 %v2554
    %v2633 = vpop.f32.mrb[0].mxu0
    %v2634 = vadd.f32 %v2546, %v2633
    %v2635 = vpop.f32.mrb[0].mxu0
    %2636 = vmatprep.mubr.f32.mxu0 0.0
    %2637 = vmatmul.mubr.f32.gmra.mrb[0].mxu0 %v2557
    %v2638 = vpop.f32.mrb[0].mxu0
    %v2639 = vadd.f32 %v2547, %v2638
    %v2640 = vpop.f32.mrb[0].mxu0
    %2641 = vmatprep.mubr.f32.mxu0 0.0
    %2642 = vmatmul.mubr.f32.gmra.mrb[0].mxu0 %v2560
    %v2643 = vpop.f32.mrb[0].mxu0
    %v2644 = vadd.f32 %v2548, %v2643
    %v2645 = vpop.f32.mrb[0].mxu0
    %2646 = vdwg.mxu0
    %v2647 = vmax.f32 %v2629, 0.0
    %v2648 = vmax.f32 %v2634, 0.0
    %v2649 = vmax.f32 %v2639, 0.0
    %v2650 = vmax.f32 %v2644, 0.0
    %v2651 = vld [vmem:[%s7] sm:$0xff]
    %v2652 = vld [vmem:[%s7 + $0x8] sm:$0x3]
    %v2653 = vld [vmem:[%s8] sm:$0xff]
    %v2654 = vld [vmem:[%s8 + $0x8] sm:$0x3]
    %vm2655 = vcmask 244736
    %v2657 = vsel %vm2655, %v2651, 0
    %v2660 = vsel %vm2655, %v2652, 0
    %v2663 = vsel %vm1711, %v2650, 0
    %2665 = vmatprep.subr.mxu0 0.0
    %2666 = vmatpush1.msra.mxu0 %v2647
    %2667 = vmatprep.subr.mxu0 0.0
    %2668 = vmatpush1.msra.mxu0 %v2648
    %2669 = vmatprep.subr.mxu0 0.0
    %2670 = vmatpush1.msra.mxu0 %v2649
    %2671 = vmatprep.subr.mxu0 0.0
    %2672 = vmatpush1.msra.mxu0 %v2663
    %2673 = vmatprep.subr.mxu0 0.0
    %2674 = vmatpush1.msra.mxu0 0.0
    %2675 = vmatprep.subr.mxu0 0.0
    %2676 = vmatpush1.msra.mxu0 0.0
    %2677 = vmatprep.subr.mxu0 0.0
    %2678 = vmatpush1.msra.mxu0 0.0
    %2679 = vmatprep.subr.mxu0 0.0
    %2680 = vmatpush1.msra.mxu0 0.0
    %2681 = vmatprep.subr.mxu0 0.0
    %2682 = vmatpush1.msra.mxu0 0.0
    %2683 = vmatprep.subr.mxu0 0.0
    %2684 = vmatpush1.msra.mxu0 0.0
    %2685 = vmatprep.subr.mxu0 0.0
    %2686 = vmatpush1.msra.mxu0 0.0
    %2687 = vmatprep.subr.mxu0 0.0
    %2688 = vmatpush1.msra.mxu0 0.0
    %2689 = vmatprep.subr.mxu0 0.0
    %2690 = vmatpush1.msra.mxu0 0.0
    %2691 = vmatprep.subr.mxu0 0.0
    %2692 = vmatpush1.msra.mxu0 0.0
    %2693 = vmatprep.subr.mxu0 0.0
    %2694 = vmatpush1.msra.mxu0 0.0
    %2695 = vmatprep.subr.mxu0 0.0
    %2696 = vmatpush1.msra.mxu0 0.0
    %2697 = vmatprep.subr.mxu0 0.0
    %2698 = vmatpush1.msra.mxu0 0.0
    %2699 = vmatprep.subr.mxu0 0.0
    %2700 = vmatpush1.msra.mxu0 0.0
    %2701 = vmatprep.subr.mxu0 0.0
    %2702 = vmatpush1.msra.mxu0 0.0
    %2703 = vmatprep.subr.mxu0 0.0
    %2704 = vmatpush1.msra.mxu0 0.0
    %2705 = vmatprep.subr.mxu0 0.0
    %2706 = vmatpush1.msra.mxu0 0.0
    %2707 = vmatprep.subr.mxu0 0.0
    %2708 = vmatpush1.msra.mxu0 0.0
    %2709 = vmatprep.subr.mxu0 0.0
    %2710 = vmatpush1.msra.mxu0 0.0
    %2711 = vmatprep.subr.mxu0 0.0
    %2712 = vmatpush1.msra.mxu0 0.0
    %2713 = vmatprep.subr.mxu0 0.0
    %2714 = vmatpush1.msra.mxu0 0.0
    %2715 = vmatprep.subr.mxu0 0.0
    %2716 = vmatpush1.msra.mxu0 0.0
    %2717 = vmatprep.subr.mxu0 0.0
    %2718 = vmatpush1.msra.mxu0 0.0
    %2719 = vmatprep.subr.mxu0 0.0
    %2720 = vmatpush1.msra.mxu0 0.0
    %2721 = vmatprep.subr.mxu0 0.0
    %2722 = vmatpush1.msra.mxu0 0.0
    %2723 = vmatprep.subr.mxu0 0.0
    %2724 = vmatpush1.msra.mxu0 0.0
    %2725 = vmatprep.subr.mxu0 0.0
    %2726 = vmatpush1.msra.mxu0 0.0
    %2727 = vmatprep.subr.mxu0 0.0
    %2728 = vmatpush1.msra.mxu0 0.0
    %2729 = vmatprep.mubr.f32.mxu0 0.0
    %2730 = vmatmul.mubr.f32.gmra.mrb[0].mxu0 %v2657
    %v2731 = vpop.f32.mrb[0].mxu0
    %v2732 = vadd.f32 %v2653, %v2731
    %v2733 = vpop.f32.mrb[0].mxu0
    %2734 = vmatprep.mubr.f32.mxu0 0.0
    %2735 = vmatmul.mubr.f32.gmra.mrb[0].mxu0 %v2660
    %v2736 = vpop.f32.mrb[0].mxu0
    %v2737 = vadd.f32 %v2654, %v2736
    %v2738 = vpop.f32.mrb[0].mxu0
    %2739 = vdwg.mxu0
    %v2740 = vmax.f32 %v2732, 0.0
    %v2741 = vmax.f32 %v2737, 0.0
    %v2742 = vld [vmem:[%s9] sm:$0xff]
    %v2743 = vld [vmem:[%s9 + $0x8] sm:$0x3]
    %v2744 = vld [vmem:[%s10] sm:$0xff]
    %v2745 = vld [vmem:[%s10 + $0x8] sm:$0x3]
    %vm2746 = vcmask 80896
    %v2748 = vsel %vm2746, %v2742, 0
    %v2751 = vsel %vm2746, %v2743, 0
    %v2754 = vsel %vm2231, %v2741, 0
    %2756 = vmatprep.subr.mxu0 0.0
    %2757 = vmatpush1.msra.mxu0 %v2740
    %2758 = vmatprep.subr.mxu0 0.0
    %2759 = vmatpush1.msra.mxu0 %v2754
    %2760 = vmatprep.subr.mxu0 0.0
    %2761 = vmatpush1.msra.mxu0 0.0
    %2762 = vmatprep.subr.mxu0 0.0
    %2763 = vmatpush1.msra.mxu0 0.0
    %2764 = vmatprep.subr.mxu0 0.0
    %2765 = vmatpush1.msra.mxu0 0.0
    %2766 = vmatprep.subr.mxu0 0.0
    %2767 = vmatpush1.msra.mxu0 0.0
    %2768 = vmatprep.subr.mxu0 0.0
    %2769 = vmatpush1.msra.mxu0 0.0
    %2770 = vmatprep.subr.mxu0 0.0
    %2771 = vmatpush1.msra.mxu0 0.0
    %2772 = vmatprep.subr.mxu0 0.0
    %2773 = vmatpush1.msra.mxu0 0.0
    %2774 = vmatprep.subr.mxu0 0.0
    %2775 = vmatpush1.msra.mxu0 0.0
    %2776 = vmatprep.subr.mxu0 0.0
    %2777 = vmatpush1.msra.mxu0 0.0
    %2778 = vmatprep.subr.mxu0 0.0
    %2779 = vmatpush1.msra.mxu0 0.0
    %2780 = vmatprep.subr.mxu0 0.0
    %2781 = vmatpush1.msra.mxu0 0.0
    %2782 = vmatprep.subr.mxu0 0.0
    %2783 = vmatpush1.msra.mxu0 0.0
    %2784 = vmatprep.subr.mxu0 0.0
    %2785 = vmatpush1.msra.mxu0 0.0
    %2786 = vmatprep.subr.mxu0 0.0
    %2787 = vmatpush1.msra.mxu0 0.0
    %2788 = vmatprep.subr.mxu0 0.0
    %2789 = vmatpush1.msra.mxu0 0.0
    %2790 = vmatprep.subr.mxu0 0.0
    %2791 = vmatpush1.msra.mxu0 0.0
    %2792 = vmatprep.subr.mxu0 0.0
    %2793 = vmatpush1.msra.mxu0 0.0
    %2794 = vmatprep.subr.mxu0 0.0
    %2795 = vmatpush1.msra.mxu0 0.0
    %2796 = vmatprep.subr.mxu0 0.0
    %2797 = vmatpush1.msra.mxu0 0.0
    %2798 = vmatprep.subr.mxu0 0.0
    %2799 = vmatpush1.msra.mxu0 0.0
    %2800 = vmatprep.subr.mxu0 0.0
    %2801 = vmatpush1.msra.mxu0 0.0
    %2802 = vmatprep.subr.mxu0 0.0
    %2803 = vmatpush1.msra.mxu0 0.0
    %2804 = vmatprep.subr.mxu0 0.0
    %2805 = vmatpush1.msra.mxu0 0.0
    %2806 = vmatprep.subr.mxu0 0.0
    %2807 = vmatpush1.msra.mxu0 0.0
    %2808 = vmatprep.subr.mxu0 0.0
    %2809 = vmatpush1.msra.mxu0 0.0
    %2810 = vmatprep.subr.mxu0 0.0
    %2811 = vmatpush1.msra.mxu0 0.0
    %2812 = vmatprep.subr.mxu0 0.0
    %2813 = vmatpush1.msra.mxu0 0.0
    %2814 = vmatprep.subr.mxu0 0.0
    %2815 = vmatpush1.msra.mxu0 0.0
    %2816 = vmatprep.subr.mxu0 0.0
    %2817 = vmatpush1.msra.mxu0 0.0
    %2818 = vmatprep.subr.mxu0 0.0
    %2819 = vmatpush1.msra.mxu0 0.0
    %2820 = vmatprep.mubr.f32.mxu0 0.0
    %2821 = vmatmul.mubr.f32.gmra.mrb[0].mxu0 %v2748
    %v2822 = vpop.f32.mrb[0].mxu0
    %v2823 = vadd.f32 %v2744, %v2822
    %v2824 = vpop.f32.mrb[0].mxu0
    %2825 = vmatprep.mubr.f32.mxu0 0.0
    %2826 = vmatmul.mubr.f32.gmra.mrb[0].mxu0 %v2751
    %v2827 = vpop.f32.mrb[0].mxu0
    %v2828 = vadd.f32 %v2745, %v2827
    %v2829 = vpop.f32.mrb[0].mxu0
    %2830 = vdwg.mxu0
    %2831 = vst [vmem:[#allocation2] sm:$0xff] %v2823
    %2832 = vst [vmem:[#allocation2 + $0x8] sm:$0x3] %v2828
    // Predicated region
    $region46: #{tpu_custom_call.1} parent=1 // pred_check
      _
    $region47: #{tpu_custom_call.1} parent=1 // pred_check_branch
      %2834 = sbr.rel (0) target = $region49
    $region48: #{tpu_custom_call.1} parent=1 // pred_region
      %s2836 = ssub.s32 256, 256
      %2837 = vsyncadd [#allocation3], %s2836
      %s2838 = sshll.u32 [#allocation2], 4
      %s2839 = int_to_ptr.vmem [resolvable:$true] %s2838
      %2844 = dma.vmem_to_hbm [thread:$0]  %s2839, 256, %s11, [#allocation3], 128, 128, 8
    $region49: #{tpu_custom_call.1} parent=1 // pred_fallthru
      _
    // Predicated region
    $region50: #{tpu_custom_call.1} parent=1 // pred_check
      _
    $region51: #{tpu_custom_call.1} parent=1 // pred_check_branch
      %2846 = sbr.rel (0) target = $region53
    $region52: #{tpu_custom_call.1} parent=1 // pred_region
      %2847 = dma.done [#allocation3], 256
    $region53: #{tpu_custom_call.1} parent=1 // pred_fallthru
      _
    %2848 = vsyncpa [#allocation3], 1

</llo_original>
